<compile_context>
chip_gen: v7x
topology: tpu7x:2x2x1
jax: 0.10.0
libtpu: 0.0.40
codegen_flags: <defaults>
</compile_context>

<pallas_src>
import functools
import math

import jax
import jax.numpy as jnp
from jax.experimental import pallas as pl
from jax.experimental.pallas import tpu as pltpu

# ----------------------------- model constants (scaled-down) ---------------
B = 2                     # batch
D = 64                    # decoder embed dim   (stand-in for 2048)
FFN = 128                 # decoder ffn dim     (stand-in for 8192)
N_LAYERS = 2              # decoder layers      (stand-in for 24)
N_HEADS = 4               # decoder heads       (stand-in for 32)
HEAD_DIM = D // N_HEADS
VOCAB = 128               # vocab               (stand-in for 32002)
MAX_POS = 32
T_TEXT = 8                # text tokens per example

IMG_C, IMG_HW, PATCH = 4, 16, 8
IMG_DIM = 32              # CLIP hidden dim     (stand-in for 1024)
CLIP_HEADS, CLIP_HD = 2, 16

NUM_LATENTS = 4           # perceiver latents   (stand-in for 64)
PERC_DEPTH = 2
PERC_HEADS, PERC_HD = 2, 16

AUD_LEN, AUD_FRAME, AUD_DIM = 64, 8, 32   # AUD_DIM stand-in for 768
VID_T, VID_C, VID_HW = 4, 4, 16
VID_PT, VID_PS, VID_DIM = 2, 8, 32        # VID_DIM stand-in for 512

EMBED_SCALE = math.sqrt(D)
BF16 = jnp.bfloat16

_VMEM = pl.BlockSpec(memory_space=pltpu.MemorySpace.VMEM)


# ----------------------------- in-kernel helpers (all f32) -----------------
def _gelu(x):
    # tanh approximation (see TODO at top of file).
    return 0.5 * x * (1.0 + jnp.tanh(0.7978845608028654 *
                                     (x + 0.044715 * x * x * x)))


def _ln_f32(x, g, b, eps=1e-5):
    mu = jnp.mean(x, axis=-1, keepdims=True)
    var = jnp.mean((x - mu) ** 2, axis=-1, keepdims=True)
    return ((x - mu) * jax.lax.rsqrt(var + eps)
            * g.astype(jnp.float32) + b.astype(jnp.float32))


def _mha_into(x_flat, q, kv_list, wo, heads, dh, causal):
    """Multi-head attention accumulated straight into the residual stream.

    x_flat : (B*Sq, D) f32 residual slab.
    q      : (B, Sq, heads*dh) f32.
    kv_list: list of (k, v) segments, each (B, Sk_i, heads*dh) f32, attended
             jointly (softmax over the union) via a two-block softmax -- no
             concatenated K/V slab is materialized.
    wo     : (heads*dh, D) bf16.
    Per-head outputs are accumulated through Wo row blocks (no lane concat).
    TODO(synk): pack heads into wide batched contractions at real head_dim.
    """
    Bb, Sq, _ = q.shape
    out = x_flat

    mask = None
    if causal:
        # mask built once and reused by every head (JAX does not CSE iota).
        Sk0 = kv_list[0][0].shape[1]
        qi = jax.lax.broadcasted_iota(jnp.int32, (Sq, Sk0), 0)
        ki = jax.lax.broadcasted_iota(jnp.int32, (Sq, Sk0), 1)
        mask = (ki <= qi)[None]                       # (1, Sq, Sk)

    for hh in range(heads):
        sl = slice(hh * dh, (hh + 1) * dh)
        q_h = q[:, :, sl]

        s_parts = []
        for (k_seg, _) in kv_list:
            s = jnp.einsum('bqd,bkd->bqk', q_h, k_seg[:, :, sl],
                           preferred_element_type=jnp.float32)
            s_parts.append(s)
        if mask is not None:
            s_parts[0] = jnp.where(mask, s_parts[0], -1e30)

        m = s_parts[0].max(axis=-1, keepdims=True)
        for s in s_parts[1:]:
            m = jnp.maximum(m, s.max(axis=-1, keepdims=True))

        p0 = jnp.exp(s_parts[0] - m)
        l = p0.sum(axis=-1, keepdims=True)
        oh = jnp.einsum('bqk,bkd->bqd', p0, kv_list[0][1][:, :, sl],
                        preferred_element_type=jnp.float32)
        for s, (_, v_seg) in zip(s_parts[1:], kv_list[1:]):
            p = jnp.exp(s - m)
            l = l + p.sum(axis=-1, keepdims=True)
            oh = oh + jnp.einsum('bqk,bkd->bqd', p, v_seg[:, :, sl],
                                 preferred_element_type=jnp.float32)

        oh = oh * pl.reciprocal(l, approx=True)       # EUP slot; VPU stays free
        # accumulate through Wo's row block -> lane-dense f32 accumulation.
        out = out + jnp.dot(oh.reshape(Bb * Sq, dh).astype(BF16), wo[sl, :],
                            preferred_element_type=jnp.float32)
    return out


def _block_body(x, batch, ln1g, ln1b, wq, wk, wv, wo, ln2g, ln2b,
                w1, b1, w2, b2, *, heads, dh, causal, final_ln=None):
    """Pre-LN transformer block on a flat (B*S, D) f32 residual slab."""
    BS, Dm = x.shape
    S = BS // batch

    h = _ln_f32(x, ln1g, ln1b).astype(BF16)
    # Q/K/V via three matmuls from the same LN result (1/sqrt(dh) folded in Wq).
    q = jnp.dot(h, wq, preferred_element_type=jnp.float32).reshape(batch, S, -1)
    k = jnp.dot(h, wk, preferred_element_type=jnp.float32).reshape(batch, S, -1)
    v = jnp.dot(h, wv, preferred_element_type=jnp.float32).reshape(batch, S, -1)
    x = _mha_into(x, q, [(k, v)], wo, heads, dh, causal)

    h = _ln_f32(x, ln2g, ln2b).astype(BF16)
    f = jnp.dot(h, w1, preferred_element_type=jnp.float32) + b1.astype(jnp.float32)
    f = _gelu(f)
    x = x + (jnp.dot(f.astype(BF16), w2, preferred_element_type=jnp.float32)
             + b2.astype(jnp.float32))

    if final_ln is not None:
        x = _ln_f32(x, final_ln[0], final_ln[1])
    return x


def _block_weights(p):
    return [p["ln1_g"], p["ln1_b"], p["wq"], p["wk"], p["wv"], p["wo"],
            p["ln2_g"], p["ln2_b"], p["w1"], p["b1"], p["w2"], p["b2"]]


# ----------------------------- fused decoder block --------------------------
def _block_kernel(*refs, batch, heads, dh, causal, has_pos):
    it = iter(refs)
    x_ref = next(it)
    pos_ref = next(it) if has_pos else None
    ws = [next(it)[...] for _ in range(12)]
    o_ref = next(it)

    x = x_ref[...].astype(jnp.float32)                # (B*S, D)
    if has_pos:
        x = x + pos_ref[...].astype(jnp.float32)
    y = _block_body(x, batch, *ws, heads=heads, dh=dh, causal=causal)
    o_ref[...] = y.astype(o_ref.dtype)


def fused_block(x2d, p, batch, causal, pos2d=None):
    M, Dm = x2d.shape
    has_pos = pos2d is not None
    args = [x2d] + ([pos2d] if has_pos else []) + _block_weights(p)
    return pl.pallas_call(
        functools.partial(_block_kernel, batch=batch, heads=p["heads"],
                          dh=p["dim_head"], causal=causal, has_pos=has_pos),
        out_shape=jax.ShapeDtypeStruct((M, Dm), jnp.float32),
        in_specs=[_VMEM] * len(args),
        out_specs=_VMEM,
    )(*args)


# ----------------------------- fused CLIP encoder block ---------------------
def _clip_kernel(patches_ref, pw, pb, poscls_ref, *rest, batch, heads, dh):
    it = iter(rest)
    ws = [next(it)[...] for _ in range(12)]
    lnfg = next(it)[...]
    lnfb = next(it)[...]
    o_ref = next(it)

    # patch embed fused in; CLS row is a zero patch whose embedding is folded
    # into row 0 of the (pre-tiled) positional table.
    x = (jnp.dot(patches_ref[...], pw[...], preferred_element_type=jnp.float32)
         + pb[...].astype(jnp.float32)
         + poscls_ref[...].astype(jnp.float32))       # (B*S_img, IMG_DIM)
    y = _block_body(x, batch, *ws, heads=heads, dh=dh, causal=False,
                    final_ln=(lnfg, lnfb))
    o_ref[...] = y.astype(o_ref.dtype)


def clip_encode(patches2d, poscls2d, cp, batch):
    blk = cp["block"]
    args = [patches2d, cp["patch_w"], cp["patch_b"], poscls2d] \
        + _block_weights(blk) + [cp["lnf_g"], cp["lnf_b"]]
    M = patches2d.shape[0]
    return pl.pallas_call(
        functools.partial(_clip_kernel, batch=batch, heads=blk["heads"],
                          dh=blk["dim_head"]),
        out_shape=jax.ShapeDtypeStruct((M, IMG_DIM), jnp.float32),
        in_specs=[_VMEM] * len(args),
        out_specs=_VMEM,
    )(*args)


# ----------------------------- fused perceiver layer ------------------------
def _perceiver_kernel(lat_ref, med_ref, lnl_g, lnl_b, lnm_g, lnm_b,
                      wq, wk, wv, wo, lnf_g, lnf_b, w1, b1, w2, b2, o_ref,
                      *, heads, dh):
    lat = lat_ref[...].astype(jnp.float32)            # (B, L, Dm)
    med = med_ref[...].astype(jnp.float32)            # (B, M, Dm)
    Bb, L, Dm = lat.shape
    M = med.shape[1]

    lat_flat = lat.reshape(Bb * L, Dm)
    hl = _ln_f32(lat_flat, lnl_g[...], lnl_b[...]).astype(BF16)
    hm = _ln_f32(med.reshape(Bb * M, Dm), lnm_g[...], lnm_b[...]).astype(BF16)

    q = jnp.dot(hl, wq[...], preferred_element_type=jnp.float32).reshape(Bb, L, -1)
    # Flamingo-style kv-source = [media, latents]: two K/V segments attended
    # jointly (two-block softmax), no concatenated slab materialized.
    km = jnp.dot(hm, wk[...], preferred_element_type=jnp.float32).reshape(Bb, M, -1)
    vm = jnp.dot(hm, wv[...], preferred_element_type=jnp.float32).reshape(Bb, M, -1)
    kl = jnp.dot(hl, wk[...], preferred_element_type=jnp.float32).reshape(Bb, L, -1)
    vl = jnp.dot(hl, wv[...], preferred_element_type=jnp.float32).reshape(Bb, L, -1)
    lat_flat = _mha_into(lat_flat, q, [(km, vm), (kl, vl)], wo[...],
                         heads, dh, causal=False)

    h = _ln_f32(lat_flat, lnf_g[...], lnf_b[...]).astype(BF16)
    f = jnp.dot(h, w1[...], preferred_element_type=jnp.float32) \
        + b1[...].astype(jnp.float32)
    f = _gelu(f)
    lat_flat = lat_flat + (jnp.dot(f.astype(BF16), w2[...],
                                   preferred_element_type=jnp.float32)
                           + b2[...].astype(jnp.float32))
    o_ref[...] = lat_flat.reshape(Bb, L, Dm).astype(o_ref.dtype)


def fused_perceiver_layer(latents, media, p):
    Bb, L, Dm = latents.shape
    args = [latents, media,
            p["ln_l_g"], p["ln_l_b"], p["ln_m_g"], p["ln_m_b"],
            p["wq"], p["wk"], p["wv"], p["wo"],
            p["ln_f_g"], p["ln_f_b"], p["w1"], p["b1"], p["w2"], p["b2"]]
    return pl.pallas_call(
        functools.partial(_perceiver_kernel, heads=p["heads"], dh=p["dim_head"]),
        out_shape=jax.ShapeDtypeStruct((Bb, L, Dm), jnp.float32),
        in_specs=[_VMEM] * len(args),
        out_specs=_VMEM,
    )(*args)


# ----------------------------- fused LN + projection ------------------------
def _ln_proj_kernel(x_ref, g_ref, b_ref, w_ref, o_ref):
    x = x_ref[...].astype(jnp.float32)
    h = _ln_f32(x, g_ref[...], b_ref[...])
    o_ref[...] = jnp.dot(h.astype(BF16), w_ref[...],
                         preferred_element_type=jnp.float32).astype(o_ref.dtype)


def ln_proj(x, g, b, w, out_dtype=BF16):
    """Fused LayerNorm + (no-bias) projection on a (..., Din) tensor.

    TODO(synk): at real vocab (2048x32002) this needs N-tiling in 128-multiples
                with the LN(x) result resident across N tiles.
    """
    lead = x.shape[:-1]
    Din = x.shape[-1]
    Dout = w.shape[-1]
    M = int(math.prod(lead)) if lead else 1
    out = pl.pallas_call(
        _ln_proj_kernel,
        out_shape=jax.ShapeDtypeStruct((M, Dout), out_dtype),
        in_specs=[_VMEM, _VMEM, _VMEM, _VMEM],
        out_specs=_VMEM,
    )(x.reshape(M, Din), g, b, w)
    return out.reshape(*lead, Dout)


# ----------------------------- fused audio+video encoder --------------------
def _mm_encoder_kernel(aud_ref, aw1, ab1, aw2, ab2, aproj,
                       vid_ref, vw, vb, vproj, aud_out, vid_out,
                       *, batch, aud_frames, vid_patches):
    # --- audio: MLP + GELU + time-mean + modality proj (EMBED_SCALE folded) ---
    h = jnp.dot(aud_ref[...], aw1[...], preferred_element_type=jnp.float32) \
        + ab1[...].astype(jnp.float32)
    h = _gelu(h)
    h = jnp.dot(h.astype(BF16), aw2[...], preferred_element_type=jnp.float32) \
        + ab2[...].astype(jnp.float32)
    pooled = jnp.mean(h.reshape(batch, aud_frames, -1), axis=1)
    aud_out[...] = jnp.dot(pooled.astype(BF16), aproj[...],
                           preferred_element_type=jnp.float32).astype(aud_out.dtype)

    # --- video: patch linear + ReLU + global mean pool + modality proj ---
    hv = jnp.dot(vid_ref[...], vw[...], preferred_element_type=jnp.float32) \
        + vb[...].astype(jnp.float32)
    hv = jnp.maximum(hv, 0.0)
    pooledv = jnp.mean(hv.reshape(batch, vid_patches, -1), axis=1)
    vid_out[...] = jnp.dot(pooledv.astype(BF16), vproj[...],
                           preferred_element_type=jnp.float32).astype(vid_out.dtype)


def multimodal_encode(frames2d, audp, audio_proj, vpatches2d, vidp, video_proj,
                      batch):
    aud_frames = frames2d.shape[0] // batch
    vid_patches = vpatches2d.shape[0] // batch
    return pl.pallas_call(
        functools.partial(_mm_encoder_kernel, batch=batch,
                          aud_frames=aud_frames, vid_patches=vid_patches),
        out_shape=(jax.ShapeDtypeStruct((batch, audio_proj.shape[-1]), BF16),
                   jax.ShapeDtypeStruct((batch, video_proj.shape[-1]), BF16)),
        in_specs=[_VMEM] * 10,
        out_specs=(_VMEM, _VMEM),
    )(frames2d, audp["w1"], audp["b1"], audp["w2"], audp["b2"], audio_proj,
      vpatches2d, vidp["w"], vidp["b"], video_proj)


# ----------------------------- parameter init -------------------------------
def _normal(key, shape, std=0.02):
    return std * jax.random.normal(key, shape, dtype=jnp.float32)


def init_fused_block(key, d, ffn, heads, dim_head):
    ks = jax.random.split(key, 6)
    inner = heads * dim_head
    scale = dim_head ** (-0.5)
    return {
        "heads": heads, "dim_head": dim_head,
        "ln1_g": jnp.ones((1, d)), "ln1_b": jnp.zeros((1, d)),
        "ln2_g": jnp.ones((1, d)), "ln2_b": jnp.zeros((1, d)),
        "wq": (_normal(ks[0], (d, inner)) * scale).astype(BF16),  # 1/sqrt(dh) folded
        "wk": _normal(ks[1], (d, inner)).astype(BF16),
        "wv": _normal(ks[2], (d, inner)).astype(BF16),
        "wo": _normal(ks[3], (inner, d)).astype(BF16),
        "w1": _normal(ks[4], (d, ffn)).astype(BF16), "b1": jnp.zeros((1, ffn)),
        "w2": _normal(ks[5], (ffn, d)).astype(BF16), "b2": jnp.zeros((1, d)),
    }


def init_perc_layer(key, d, heads, dim_head):
    ks = jax.random.split(key, 6)
    inner = heads * dim_head
    scale = dim_head ** (-0.5)
    return {
        "heads": heads, "dim_head": dim_head,
        "ln_l_g": jnp.ones((1, d)), "ln_l_b": jnp.zeros((1, d)),
        "ln_m_g": jnp.ones((1, d)), "ln_m_b": jnp.zeros((1, d)),
        "ln_f_g": jnp.ones((1, d)), "ln_f_b": jnp.zeros((1, d)),
        "wq": (_normal(ks[0], (d, inner)) * scale).astype(BF16),
        "wk": _normal(ks[1], (d, inner)).astype(BF16),
        "wv": _normal(ks[2], (d, inner)).astype(BF16),
        "wo": _normal(ks[3], (inner, d)).astype(BF16),
        "w1": _normal(ks[4], (d, 2 * d)).astype(BF16), "b1": jnp.zeros((1, 2 * d)),
        "w2": _normal(ks[5], (2 * d, d)).astype(BF16), "b2": jnp.zeros((1, d)),
    }


def init_params(key):
    keys = jax.random.split(key, 16)
    n_img_tok = (IMG_HW // PATCH) ** 2 + 1
    embed = _normal(keys[0], (VOCAB, D))
    embed = embed.at[1].set(0.0)                      # padding_idx = 1
    proj_std = D ** (-0.5)

    # CLIP positional table with CLS folded into row 0 (the CLS "patch" row fed
    # to the kernel is all zeros, so row 0 also cancels the patch bias).
    patch_b = jnp.zeros((1, IMG_DIM))
    cls = _normal(keys[7], (1, IMG_DIM))
    clip_pos = _normal(keys[8], (n_img_tok, IMG_DIM))
    pos_cls = clip_pos.at[0].add(cls[0] - patch_b[0])

    return {
        # EMBED_SCALE folded into the embedding table and modality projections.
        "embed": (embed * EMBED_SCALE).astype(BF16),
        "pos_embed": _normal(keys[1], (MAX_POS, D)),
        "out_proj": _normal(keys[2], (D, VOCAB), std=proj_std).astype(BF16),
        "image_proj": (_normal(keys[3], (IMG_DIM, D), std=proj_std)
                       * EMBED_SCALE).astype(BF16),
        "audio_proj": (_normal(keys[4], (AUD_DIM, D), std=proj_std)
                       * EMBED_SCALE).astype(BF16),
        "video_proj": (_normal(keys[5], (VID_DIM, D), std=proj_std)
                       * EMBED_SCALE).astype(BF16),
        "clip": {
            "patch_w": _normal(keys[6], (PATCH * PATCH * IMG_C, IMG_DIM)).astype(BF16),
            "patch_b": patch_b,
            "pos_cls": pos_cls,
            "block": init_fused_block(keys[9], IMG_DIM, 2 * IMG_DIM,
                                      CLIP_HEADS, CLIP_HD),
            "lnf_g": jnp.ones((1, IMG_DIM)), "lnf_b": jnp.zeros((1, IMG_DIM)),
        },
        "perc": {
            "latents": _normal(keys[10], (NUM_LATENTS, IMG_DIM)).astype(BF16),
            "layers": [init_perc_layer(k, IMG_DIM, PERC_HEADS, PERC_HD)
                       for k in jax.random.split(keys[11], PERC_DEPTH)],
            "lnf_g": jnp.ones((1, IMG_DIM)), "lnf_b": jnp.zeros((1, IMG_DIM)),
        },
        "audio": {
            "w1": _normal(keys[12], (AUD_FRAME, AUD_DIM)).astype(BF16),
            "b1": jnp.zeros((1, AUD_DIM)),
            "w2": _normal(keys[13], (AUD_DIM, AUD_DIM)).astype(BF16),
            "b2": jnp.zeros((1, AUD_DIM)),
        },
        "video": {
            "w": _normal(keys[14], (VID_PT * VID_PS * VID_PS * VID_C, VID_DIM)).astype(BF16),
            "b": jnp.zeros((1, VID_DIM)),
        },
        "decoder": {
            "layers": [init_fused_block(k, D, FFN, N_HEADS, HEAD_DIM)
                       for k in jax.random.split(keys[15], N_LAYERS)],
            "lnf_g": jnp.ones((1, D)), "lnf_b": jnp.zeros((1, D)),
        },
    }


# ----------------------------- Kosmos forward -------------------------------
def kosmos_forward(params, text_tokens, images, audios, videos):
    Bb = text_tokens.shape[0]

    # ---- CLIP vision stand-in: patchify (glue) + one fused kernel -----------
    x = jnp.transpose(images, (0, 2, 3, 1))                     # NCHW -> NHWC
    _, Hh, Wh, Ch = x.shape
    n_patch = (Hh // PATCH) * (Wh // PATCH)
    x = x.reshape(Bb, Hh // PATCH, PATCH, Wh // PATCH, PATCH, Ch)
    x = x.transpose(0, 1, 3, 2, 4, 5).reshape(Bb, n_patch, PATCH * PATCH * Ch)
    # zero "patch" row per example at position 0 = CLS slot.
    patches_aug = jnp.pad(x, ((0, 0), (1, 0), (0, 0))).astype(BF16)
    s_img = n_patch + 1
    patches2d = patches_aug.reshape(Bb * s_img, PATCH * PATCH * Ch)
    poscls2d = jnp.tile(params["clip"]["pos_cls"], (Bb, 1))
    clip_out = clip_encode(patches2d, poscls2d, params["clip"], Bb)
    media = clip_out.reshape(Bb, s_img, IMG_DIM)                 # (B, 5, IMG_DIM) f32

    # ---- PerceiverResampler (fused layers) + fused final-LN + image_proj ----
    latents = jnp.broadcast_to(params["perc"]["latents"][None],
                               (Bb, NUM_LATENTS, IMG_DIM))
    for lp in params["perc"]["layers"]:
        latents = fused_perceiver_layer(latents, media, lp)
    img_tok = ln_proj(latents, params["perc"]["lnf_g"], params["perc"]["lnf_b"],
                      params["image_proj"])                      # (B, NUM_LATENTS, D)

    # ---- audio (Data2Vec stand-in) + video (r3d_18 stand-in), one kernel ----
    frames2d = audios.reshape(Bb * (AUD_LEN // AUD_FRAME), AUD_FRAME).astype(BF16)
    v = jnp.transpose(videos, (0, 2, 1, 3, 4))        # (B,T,C,H,W)->(B,C,T,H,W)
    v = jnp.transpose(v, (0, 2, 3, 4, 1))             # channels-last (B,T,H,W,C)
    _, Tt, Ht, Wt, Ct = v.shape
    n_vp = (Tt // VID_PT) * (Ht // VID_PS) * (Wt // VID_PS)
    v = v.reshape(Bb, Tt // VID_PT, VID_PT, Ht // VID_PS, VID_PS,
                  Wt // VID_PS, VID_PS, Ct)
    v = v.transpose(0, 1, 3, 5, 2, 4, 6, 7).reshape(
        Bb * n_vp, VID_PT * VID_PS * VID_PS * Ct).astype(BF16)
    aud_vec, vid_vec = multimodal_encode(frames2d, params["audio"],
                                         params["audio_proj"],
                                         v, params["video"],
                                         params["video_proj"], Bb)
    aud_tok = aud_vec[:, None, :]                               # (B, 1, D)
    vid_tok = vid_vec[:, None, :]                               # (B, 1, D)

    # ---- decoder.forward_embedding(text_tokens)[1] == raw token embedding ---
    # (EMBED_SCALE is pre-folded into the table and modality projections.)
    tok_emb = jnp.take(params["embed"], text_tokens, axis=0)    # (B, T, D)

    # ---- splice multimodal tokens into the text stream ----------------------
    model_input = jnp.concatenate(
        [tok_emb[:, 0:6], img_tok, aud_tok, vid_tok, tok_emb[:, 6:]], axis=1)
    S = model_input.shape[1]
    x2d = model_input.reshape(Bb * S, D)
    pos2d = jnp.broadcast_to(params["pos_embed"][None, :S],
                             (Bb, S, D)).reshape(Bb * S, D)

    # ---- decoder: pos-add fused into layer 0; causal fused blocks, f32 carry -
    layers = params["decoder"]["layers"]
    x2d = fused_block(x2d, layers[0], Bb, causal=True, pos2d=pos2d)
    for lp in layers[1:]:
        x2d = fused_block(x2d, lp, Bb, causal=True)

    # ---- fused final LN + output projection ---------------------------------
    logits = ln_proj(x2d, params["decoder"]["lnf_g"], params["decoder"]["lnf_b"],
                     params["out_proj"], out_dtype=jnp.float32)  # (B*S, VOCAB)
    return logits.reshape(Bb, S, VOCAB)


# ----------------------------- main -----------------------------------------
if __name__ == "__main__":
    key = jax.random.PRNGKey(0)
    kp, kt, ki, ka, kv = jax.random.split(key, 5)

    params = init_params(kp)
    text_tokens = jax.random.randint(kt, (B, T_TEXT), 0, VOCAB, dtype=jnp.int32)
    images = jax.random.normal(ki, (B, IMG_C, IMG_HW, IMG_HW), dtype=jnp.float32)
    audios = jax.random.normal(ka, (B, AUD_LEN), dtype=jnp.float32)
    videos = jax.random.normal(kv, (B, VID_T, VID_C, VID_HW, VID_HW),
                               dtype=jnp.float32)

    logits = kosmos_forward(params, text_tokens, images, audios, videos)
    logits = jax.block_until_ready(logits)

    expected_seq = 6 + NUM_LATENTS + 1 + 1 + (T_TEXT - 6)
    assert logits.shape == (B, expected_seq, VOCAB), logits.shape
    assert bool(jnp.all(jnp.isfinite(logits)))
    print("KERNEL_OK")
</pallas_src>

<mosaic_0001>
module attributes {stable_mosaic.version = 11 : i64} {
  func.func @_clip_kernel(%arg0: memref<10x256xbf16, #tpu.memory_space<vmem>>, %arg1: memref<256x32xbf16, #tpu.memory_space<vmem>>, %arg2: memref<1x32xf32, #tpu.memory_space<vmem>>, %arg3: memref<10x32xf32, #tpu.memory_space<vmem>>, %arg4: memref<1x32xf32, #tpu.memory_space<vmem>>, %arg5: memref<1x32xf32, #tpu.memory_space<vmem>>, %arg6: memref<32x32xbf16, #tpu.memory_space<vmem>>, %arg7: memref<32x32xbf16, #tpu.memory_space<vmem>>, %arg8: memref<32x32xbf16, #tpu.memory_space<vmem>>, %arg9: memref<32x32xbf16, #tpu.memory_space<vmem>>, %arg10: memref<1x32xf32, #tpu.memory_space<vmem>>, %arg11: memref<1x32xf32, #tpu.memory_space<vmem>>, %arg12: memref<32x64xbf16, #tpu.memory_space<vmem>>, %arg13: memref<1x64xf32, #tpu.memory_space<vmem>>, %arg14: memref<64x32xbf16, #tpu.memory_space<vmem>>, %arg15: memref<1x32xf32, #tpu.memory_space<vmem>>, %arg16: memref<1x32xf32, #tpu.memory_space<vmem>>, %arg17: memref<1x32xf32, #tpu.memory_space<vmem>>, %arg18: memref<10x32xf32, #tpu.memory_space<vmem>>) attributes {dimension_semantics = [], scalar_prefetch = 0 : i64, scratch_operands = 0 : i64, tpu.core_type = #tpu.core_type<tc>} {
    %c0 = arith.constant 0 : index
    %c0_0 = arith.constant 0 : index
    %0 = vector.load %arg4[%c0, %c0_0] : memref<1x32xf32, #tpu.memory_space<vmem>>, vector<1x32xf32>
    %c0_1 = arith.constant 0 : index
    %c0_2 = arith.constant 0 : index
    %1 = vector.load %arg5[%c0_1, %c0_2] : memref<1x32xf32, #tpu.memory_space<vmem>>, vector<1x32xf32>
    %c0_3 = arith.constant 0 : index
    %c0_4 = arith.constant 0 : index
    %2 = vector.load %arg6[%c0_3, %c0_4] : memref<32x32xbf16, #tpu.memory_space<vmem>>, vector<32x32xbf16>
    %c0_5 = arith.constant 0 : index
    %c0_6 = arith.constant 0 : index
    %3 = vector.load %arg7[%c0_5, %c0_6] : memref<32x32xbf16, #tpu.memory_space<vmem>>, vector<32x32xbf16>
    %c0_7 = arith.constant 0 : index
    %c0_8 = arith.constant 0 : index
    %4 = vector.load %arg8[%c0_7, %c0_8] : memref<32x32xbf16, #tpu.memory_space<vmem>>, vector<32x32xbf16>
    %c0_9 = arith.constant 0 : index
    %c0_10 = arith.constant 0 : index
    %5 = vector.load %arg9[%c0_9, %c0_10] : memref<32x32xbf16, #tpu.memory_space<vmem>>, vector<32x32xbf16>
    %c0_11 = arith.constant 0 : index
    %c0_12 = arith.constant 0 : index
    %6 = vector.load %arg10[%c0_11, %c0_12] : memref<1x32xf32, #tpu.memory_space<vmem>>, vector<1x32xf32>
    %c0_13 = arith.constant 0 : index
    %c0_14 = arith.constant 0 : index
    %7 = vector.load %arg11[%c0_13, %c0_14] : memref<1x32xf32, #tpu.memory_space<vmem>>, vector<1x32xf32>
    %c0_15 = arith.constant 0 : index
    %c0_16 = arith.constant 0 : index
    %8 = vector.load %arg12[%c0_15, %c0_16] : memref<32x64xbf16, #tpu.memory_space<vmem>>, vector<32x64xbf16>
    %c0_17 = arith.constant 0 : index
    %c0_18 = arith.constant 0 : index
    %9 = vector.load %arg13[%c0_17, %c0_18] : memref<1x64xf32, #tpu.memory_space<vmem>>, vector<1x64xf32>
    %c0_19 = arith.constant 0 : index
    %c0_20 = arith.constant 0 : index
    %10 = vector.load %arg14[%c0_19, %c0_20] : memref<64x32xbf16, #tpu.memory_space<vmem>>, vector<64x32xbf16>
    %c0_21 = arith.constant 0 : index
    %c0_22 = arith.constant 0 : index
    %11 = vector.load %arg15[%c0_21, %c0_22] : memref<1x32xf32, #tpu.memory_space<vmem>>, vector<1x32xf32>
    %c0_23 = arith.constant 0 : index
    %c0_24 = arith.constant 0 : index
    %12 = vector.load %arg16[%c0_23, %c0_24] : memref<1x32xf32, #tpu.memory_space<vmem>>, vector<1x32xf32>
    %c0_25 = arith.constant 0 : index
    %c0_26 = arith.constant 0 : index
    %13 = vector.load %arg17[%c0_25, %c0_26] : memref<1x32xf32, #tpu.memory_space<vmem>>, vector<1x32xf32>
    %c0_27 = arith.constant 0 : index
    %c0_28 = arith.constant 0 : index
    %14 = vector.load %arg0[%c0_27, %c0_28] : memref<10x256xbf16, #tpu.memory_space<vmem>>, vector<10x256xbf16>
    %c0_29 = arith.constant 0 : index
    %c0_30 = arith.constant 0 : index
    %15 = vector.load %arg1[%c0_29, %c0_30] : memref<256x32xbf16, #tpu.memory_space<vmem>>, vector<256x32xbf16>
    %cst = arith.constant dense<0.000000e+00> : vector<10x32xf32>
    %16 = tpu.matmul %14, %15, %cst {dimension_numbers = #tpu.dot_dimension_numbers<[1], [0], [0], [1], [0, 0, 1, 1], [], []>} : vector<10x256xbf16>, vector<256x32xbf16>, vector<10x32xf32> -> vector<10x32xf32>
    %c0_31 = arith.constant 0 : index
    %c0_32 = arith.constant 0 : index
    %17 = vector.load %arg2[%c0_31, %c0_32] : memref<1x32xf32, #tpu.memory_space<vmem>>, vector<1x32xf32>
    %18 = vector.broadcast %17 : vector<1x32xf32> to vector<10x32xf32>
    %19 = arith.addf %16, %18 : vector<10x32xf32>
    %c0_33 = arith.constant 0 : index
    %c0_34 = arith.constant 0 : index
    %20 = vector.load %arg3[%c0_33, %c0_34] : memref<10x32xf32, #tpu.memory_space<vmem>>, vector<10x32xf32>
    %21 = arith.addf %19, %20 : vector<10x32xf32>
    %cst_35 = arith.constant dense<0.000000e+00> : vector<10xf32>
    %22 = vector.multi_reduction <add>, %21, %cst_35 [1] : vector<10x32xf32> to vector<10xf32>
    %23 = vector.shape_cast %22 : vector<10xf32> to vector<10x1xf32>
    %cst_36 = arith.constant 3.200000e+01 : f32
    %24 = vector.broadcast %cst_36 : f32 to vector<10x1xf32>
    %25 = arith.divf %23, %24 : vector<10x1xf32>
    %26 = vector.broadcast %25 : vector<10x1xf32> to vector<10x32xf32>
    %27 = arith.subf %21, %26 : vector<10x32xf32>
    %28 = arith.mulf %27, %27 : vector<10x32xf32>
    %cst_37 = arith.constant dense<0.000000e+00> : vector<10xf32>
    %29 = vector.multi_reduction <add>, %28, %cst_37 [1] : vector<10x32xf32> to vector<10xf32>
    %30 = vector.shape_cast %29 : vector<10xf32> to vector<10x1xf32>
    %cst_38 = arith.constant 3.200000e+01 : f32
    %31 = vector.broadcast %cst_38 : f32 to vector<10x1xf32>
    %32 = arith.divf %30, %31 : vector<10x1xf32>
    %33 = vector.broadcast %25 : vector<10x1xf32> to vector<10x32xf32>
    %34 = arith.subf %21, %33 : vector<10x32xf32>
    %cst_39 = arith.constant 9.99999974E-6 : f32
    %35 = vector.broadcast %cst_39 : f32 to vector<10x1xf32>
    %36 = arith.addf %32, %35 : vector<10x1xf32>
    %37 = math.rsqrt %36 : vector<10x1xf32>
    %38 = vector.broadcast %37 : vector<10x1xf32> to vector<10x32xf32>
    %39 = arith.mulf %34, %38 : vector<10x32xf32>
    %40 = vector.broadcast %0 : vector<1x32xf32> to vector<10x32xf32>
    %41 = arith.mulf %39, %40 : vector<10x32xf32>
    %42 = vector.broadcast %1 : vector<1x32xf32> to vector<10x32xf32>
    %43 = arith.addf %41, %42 : vector<10x32xf32>
    %44 = arith.truncf %43 : vector<10x32xf32> to vector<10x32xbf16>
    %cst_40 = arith.constant dense<0.000000e+00> : vector<10x32xf32>
    %45 = tpu.matmul %44, %2, %cst_40 {dimension_numbers = #tpu.dot_dimension_numbers<[1], [0], [0], [1], [0, 0, 1, 1], [], []>} : vector<10x32xbf16>, vector<32x32xbf16>, vector<10x32xf32> -> vector<10x32xf32>
    %46 = vector.shape_cast %45 : vector<10x32xf32> to vector<2x5x32xf32>
    %cst_41 = arith.constant dense<0.000000e+00> : vector<10x32xf32>
    %47 = tpu.matmul %44, %3, %cst_41 {dimension_numbers = #tpu.dot_dimension_numbers<[1], [0], [0], [1], [0, 0, 1, 1], [], []>} : vector<10x32xbf16>, vector<32x32xbf16>, vector<10x32xf32> -> vector<10x32xf32>
    %48 = vector.shape_cast %47 : vector<10x32xf32> to vector<2x5x32xf32>
    %cst_42 = arith.constant dense<0.000000e+00> : vector<10x32xf32>
    %49 = tpu.matmul %44, %4, %cst_42 {dimension_numbers = #tpu.dot_dimension_numbers<[1], [0], [0], [1], [0, 0, 1, 1], [], []>} : vector<10x32xbf16>, vector<32x32xbf16>, vector<10x32xf32> -> vector<10x32xf32>
    %50 = vector.shape_cast %49 : vector<10x32xf32> to vector<2x5x32xf32>
    %51 = vector.extract_strided_slice %46 {offsets = [0, 0, 0], sizes = [2, 5, 16], strides = [1, 1, 1]} : vector<2x5x32xf32> to vector<2x5x16xf32>
    %52 = vector.extract_strided_slice %48 {offsets = [0, 0, 0], sizes = [2, 5, 16], strides = [1, 1, 1]} : vector<2x5x32xf32> to vector<2x5x16xf32>
    "tpu.trace_start"() <{level = 10 : i32, message = "bqd,bkd->bqk"}> : () -> ()
    %cst_43 = arith.constant dense<0.000000e+00> : vector<2x5x5xf32>
    %53 = tpu.matmul %51, %52, %cst_43 {dimension_numbers = #tpu.dot_dimension_numbers<[2], [2], [1], [1], [0, 0, 0, 1, 1, 1], [0], [0]>} : vector<2x5x16xf32>, vector<2x5x16xf32>, vector<2x5x5xf32> -> vector<2x5x5xf32>
    "tpu.trace_stop"() : () -> ()
    %cst_44 = arith.constant dense<0xFF800000> : vector<2x5xf32>
    %54 = vector.multi_reduction <maximumf>, %53, %cst_44 [2] : vector<2x5x5xf32> to vector<2x5xf32>
    %55 = vector.shape_cast %54 : vector<2x5xf32> to vector<2x5x1xf32>
    %56 = vector.broadcast %55 : vector<2x5x1xf32> to vector<2x5x5xf32>
    %57 = arith.subf %53, %56 : vector<2x5x5xf32>
    %58 = math.exp %57 : vector<2x5x5xf32>
    %cst_45 = arith.constant dense<0.000000e+00> : vector<2x5xf32>
    %59 = vector.multi_reduction <add>, %58, %cst_45 [2] : vector<2x5x5xf32> to vector<2x5xf32>
    %60 = vector.shape_cast %59 : vector<2x5xf32> to vector<2x5x1xf32>
    %61 = vector.extract_strided_slice %50 {offsets = [0, 0, 0], sizes = [2, 5, 16], strides = [1, 1, 1]} : vector<2x5x32xf32> to vector<2x5x16xf32>
    "tpu.trace_start"() <{level = 10 : i32, message = "bqk,bkd->bqd"}> : () -> ()
    %cst_46 = arith.constant dense<0.000000e+00> : vector<2x5x16xf32>
    %62 = tpu.matmul %58, %61, %cst_46 {dimension_numbers = #tpu.dot_dimension_numbers<[2], [1], [1], [2], [0, 0, 0, 1, 1, 2], [0], [0]>} : vector<2x5x5xf32>, vector<2x5x16xf32>, vector<2x5x16xf32> -> vector<2x5x16xf32>
    "tpu.trace_stop"() : () -> ()
    %63 = tpu.reciprocal %60 {approx = true} : vector<2x5x1xf32> -> vector<2x5x1xf32>
    %64 = vector.broadcast %63 : vector<2x5x1xf32> to vector<2x5x16xf32>
    %65 = arith.mulf %62, %64 : vector<2x5x16xf32>
    %66 = vector.shape_cast %65 : vector<2x5x16xf32> to vector<10x16xf32>
    %67 = arith.truncf %66 : vector<10x16xf32> to vector<10x16xbf16>
    %68 = vector.extract_strided_slice %5 {offsets = [0, 0], sizes = [16, 32], strides = [1, 1]} : vector<32x32xbf16> to vector<16x32xbf16>
    %cst_47 = arith.constant dense<0.000000e+00> : vector<10x32xf32>
    %69 = tpu.matmul %67, %68, %cst_47 {dimension_numbers = #tpu.dot_dimension_numbers<[1], [0], [0], [1], [0, 0, 1, 1], [], []>} : vector<10x16xbf16>, vector<16x32xbf16>, vector<10x32xf32> -> vector<10x32xf32>
    %70 = arith.addf %21, %69 : vector<10x32xf32>
    %71 = vector.extract_strided_slice %46 {offsets = [0, 0, 16], sizes = [2, 5, 16], strides = [1, 1, 1]} : vector<2x5x32xf32> to vector<2x5x16xf32>
    %72 = vector.extract_strided_slice %48 {offsets = [0, 0, 16], sizes = [2, 5, 16], strides = [1, 1, 1]} : vector<2x5x32xf32> to vector<2x5x16xf32>
    "tpu.trace_start"() <{level = 10 : i32, message = "bqd,bkd->bqk"}> : () -> ()
    %cst_48 = arith.constant dense<0.000000e+00> : vector<2x5x5xf32>
    %73 = tpu.matmul %71, %72, %cst_48 {dimension_numbers = #tpu.dot_dimension_numbers<[2], [2], [1], [1], [0, 0, 0, 1, 1, 1], [0], [0]>} : vector<2x5x16xf32>, vector<2x5x16xf32>, vector<2x5x5xf32> -> vector<2x5x5xf32>
    "tpu.trace_stop"() : () -> ()
    %cst_49 = arith.constant dense<0xFF800000> : vector<2x5xf32>
    %74 = vector.multi_reduction <maximumf>, %73, %cst_49 [2] : vector<2x5x5xf32> to vector<2x5xf32>
    %75 = vector.shape_cast %74 : vector<2x5xf32> to vector<2x5x1xf32>
    %76 = vector.broadcast %75 : vector<2x5x1xf32> to vector<2x5x5xf32>
    %77 = arith.subf %73, %76 : vector<2x5x5xf32>
    %78 = math.exp %77 : vector<2x5x5xf32>
    %cst_50 = arith.constant dense<0.000000e+00> : vector<2x5xf32>
    %79 = vector.multi_reduction <add>, %78, %cst_50 [2] : vector<2x5x5xf32> to vector<2x5xf32>
    %80 = vector.shape_cast %79 : vector<2x5xf32> to vector<2x5x1xf32>
    %81 = vector.extract_strided_slice %50 {offsets = [0, 0, 16], sizes = [2, 5, 16], strides = [1, 1, 1]} : vector<2x5x32xf32> to vector<2x5x16xf32>
    "tpu.trace_start"() <{level = 10 : i32, message = "bqk,bkd->bqd"}> : () -> ()
    %cst_51 = arith.constant dense<0.000000e+00> : vector<2x5x16xf32>
    %82 = tpu.matmul %78, %81, %cst_51 {dimension_numbers = #tpu.dot_dimension_numbers<[2], [1], [1], [2], [0, 0, 0, 1, 1, 2], [0], [0]>} : vector<2x5x5xf32>, vector<2x5x16xf32>, vector<2x5x16xf32> -> vector<2x5x16xf32>
    "tpu.trace_stop"() : () -> ()
    %83 = tpu.reciprocal %80 {approx = true} : vector<2x5x1xf32> -> vector<2x5x1xf32>
    %84 = vector.broadcast %83 : vector<2x5x1xf32> to vector<2x5x16xf32>
    %85 = arith.mulf %82, %84 : vector<2x5x16xf32>
    %86 = vector.shape_cast %85 : vector<2x5x16xf32> to vector<10x16xf32>
    %87 = arith.truncf %86 : vector<10x16xf32> to vector<10x16xbf16>
    %88 = vector.extract_strided_slice %5 {offsets = [16, 0], sizes = [16, 32], strides = [1, 1]} : vector<32x32xbf16> to vector<16x32xbf16>
    %cst_52 = arith.constant dense<0.000000e+00> : vector<10x32xf32>
    %89 = tpu.matmul %87, %88, %cst_52 {dimension_numbers = #tpu.dot_dimension_numbers<[1], [0], [0], [1], [0, 0, 1, 1], [], []>} : vector<10x16xbf16>, vector<16x32xbf16>, vector<10x32xf32> -> vector<10x32xf32>
    %90 = arith.addf %70, %89 : vector<10x32xf32>
    %cst_53 = arith.constant dense<0.000000e+00> : vector<10xf32>
    %91 = vector.multi_reduction <add>, %90, %cst_53 [1] : vector<10x32xf32> to vector<10xf32>
    %92 = vector.shape_cast %91 : vector<10xf32> to vector<10x1xf32>
    %cst_54 = arith.constant 3.200000e+01 : f32
    %93 = vector.broadcast %cst_54 : f32 to vector<10x1xf32>
    %94 = arith.divf %92, %93 : vector<10x1xf32>
    %95 = vector.broadcast %94 : vector<10x1xf32> to vector<10x32xf32>
    %96 = arith.subf %90, %95 : vector<10x32xf32>
    %97 = arith.mulf %96, %96 : vector<10x32xf32>
    %cst_55 = arith.constant dense<0.000000e+00> : vector<10xf32>
    %98 = vector.multi_reduction <add>, %97, %cst_55 [1] : vector<10x32xf32> to vector<10xf32>
    %99 = vector.shape_cast %98 : vector<10xf32> to vector<10x1xf32>
    %cst_56 = arith.constant 3.200000e+01 : f32
    %100 = vector.broadcast %cst_56 : f32 to vector<10x1xf32>
    %101 = arith.divf %99, %100 : vector<10x1xf32>
    %102 = vector.broadcast %94 : vector<10x1xf32> to vector<10x32xf32>
    %103 = arith.subf %90, %102 : vector<10x32xf32>
    %cst_57 = arith.constant 9.99999974E-6 : f32
    %104 = vector.broadcast %cst_57 : f32 to vector<10x1xf32>
    %105 = arith.addf %101, %104 : vector<10x1xf32>
    %106 = math.rsqrt %105 : vector<10x1xf32>
    %107 = vector.broadcast %106 : vector<10x1xf32> to vector<10x32xf32>
    %108 = arith.mulf %103, %107 : vector<10x32xf32>
    %109 = vector.broadcast %6 : vector<1x32xf32> to vector<10x32xf32>
    %110 = arith.mulf %108, %109 : vector<10x32xf32>
    %111 = vector.broadcast %7 : vector<1x32xf32> to vector<10x32xf32>
    %112 = arith.addf %110, %111 : vector<10x32xf32>
    %113 = arith.truncf %112 : vector<10x32xf32> to vector<10x32xbf16>
    %cst_58 = arith.constant dense<0.000000e+00> : vector<10x64xf32>
    %114 = tpu.matmul %113, %8, %cst_58 {dimension_numbers = #tpu.dot_dimension_numbers<[1], [0], [0], [1], [0, 0, 1, 1], [], []>} : vector<10x32xbf16>, vector<32x64xbf16>, vector<10x64xf32> -> vector<10x64xf32>
    %115 = vector.broadcast %9 : vector<1x64xf32> to vector<10x64xf32>
    %116 = arith.addf %114, %115 : vector<10x64xf32>
    %cst_59 = arith.constant 5.000000e-01 : f32
    %117 = vector.broadcast %cst_59 : f32 to vector<10x64xf32>
    %118 = arith.mulf %117, %116 : vector<10x64xf32>
    %cst_60 = arith.constant 4.471500e-02 : f32
    %119 = vector.broadcast %cst_60 : f32 to vector<10x64xf32>
    %120 = arith.mulf %119, %116 : vector<10x64xf32>
    %121 = arith.mulf %120, %116 : vector<10x64xf32>
    %122 = arith.mulf %121, %116 : vector<10x64xf32>
    %123 = arith.addf %116, %122 : vector<10x64xf32>
    %cst_61 = arith.constant 0.797884583 : f32
    %124 = vector.broadcast %cst_61 : f32 to vector<10x64xf32>
    %125 = arith.mulf %124, %123 : vector<10x64xf32>
    %126 = math.tanh %125 : vector<10x64xf32>
    %cst_62 = arith.constant 1.000000e+00 : f32
    %127 = vector.broadcast %cst_62 : f32 to vector<10x64xf32>
    %128 = arith.addf %127, %126 : vector<10x64xf32>
    %129 = arith.mulf %118, %128 : vector<10x64xf32>
    %130 = arith.truncf %129 : vector<10x64xf32> to vector<10x64xbf16>
    %cst_63 = arith.constant dense<0.000000e+00> : vector<10x32xf32>
    %131 = tpu.matmul %130, %10, %cst_63 {dimension_numbers = #tpu.dot_dimension_numbers<[1], [0], [0], [1], [0, 0, 1, 1], [], []>} : vector<10x64xbf16>, vector<64x32xbf16>, vector<10x32xf32> -> vector<10x32xf32>
    %132 = vector.broadcast %11 : vector<1x32xf32> to vector<10x32xf32>
    %133 = arith.addf %131, %132 : vector<10x32xf32>
    %134 = arith.addf %90, %133 : vector<10x32xf32>
    %cst_64 = arith.constant dense<0.000000e+00> : vector<10xf32>
    %135 = vector.multi_reduction <add>, %134, %cst_64 [1] : vector<10x32xf32> to vector<10xf32>
    %136 = vector.shape_cast %135 : vector<10xf32> to vector<10x1xf32>
    %cst_65 = arith.constant 3.200000e+01 : f32
    %137 = vector.broadcast %cst_65 : f32 to vector<10x1xf32>
    %138 = arith.divf %136, %137 : vector<10x1xf32>
    %139 = vector.broadcast %138 : vector<10x1xf32> to vector<10x32xf32>
    %140 = arith.subf %134, %139 : vector<10x32xf32>
    %141 = arith.mulf %140, %140 : vector<10x32xf32>
    %cst_66 = arith.constant dense<0.000000e+00> : vector<10xf32>
    %142 = vector.multi_reduction <add>, %141, %cst_66 [1] : vector<10x32xf32> to vector<10xf32>
    %143 = vector.shape_cast %142 : vector<10xf32> to vector<10x1xf32>
    %cst_67 = arith.constant 3.200000e+01 : f32
    %144 = vector.broadcast %cst_67 : f32 to vector<10x1xf32>
    %145 = arith.divf %143, %144 : vector<10x1xf32>
    %146 = vector.broadcast %138 : vector<10x1xf32> to vector<10x32xf32>
    %147 = arith.subf %134, %146 : vector<10x32xf32>
    %cst_68 = arith.constant 9.99999974E-6 : f32
    %148 = vector.broadcast %cst_68 : f32 to vector<10x1xf32>
    %149 = arith.addf %145, %148 : vector<10x1xf32>
    %150 = math.rsqrt %149 : vector<10x1xf32>
    %151 = vector.broadcast %150 : vector<10x1xf32> to vector<10x32xf32>
    %152 = arith.mulf %147, %151 : vector<10x32xf32>
    %153 = vector.broadcast %12 : vector<1x32xf32> to vector<10x32xf32>
    %154 = arith.mulf %152, %153 : vector<10x32xf32>
    %155 = vector.broadcast %13 : vector<1x32xf32> to vector<10x32xf32>
    %156 = arith.addf %154, %155 : vector<10x32xf32>
    %c0_69 = arith.constant 0 : index
    %c0_70 = arith.constant 0 : index
    %157 = vector.load %arg18[%c0_69, %c0_70] : memref<10x32xf32, #tpu.memory_space<vmem>>, vector<10x32xf32>
    tpu.vector_store %arg18[%c0_69, %c0_70], %156 {strides = array<i32>} : memref<10x32xf32, #tpu.memory_space<vmem>>, vector<10x32xf32>,
    return
  }
}

</mosaic_0001>

<llo_original>
// kernel: tpu_custom_call.1
$region0: #{tpu_custom_call.1}
  #allocation0 [shape = 'u32[]', space=smem, size = 0x4, offset = 0x4, fixed_abs, tag = 'smem constant byte address 0x4 - core index']
  #allocation1 [shape = 'u32[144,128]{1,0:T(1,128)}', space=vmem, size = 0x12000, scoped, tag = 'internal scratch']
  %s0 = inlined_call_operand.vmem [shape: bf16[10,256], index: 0, kind: input, shape index: {}]
  %s1 = inlined_call_operand.vmem [shape: bf16[256,32], index: 1, kind: input, shape index: {}]
  %s2 = inlined_call_operand.vmem [shape: f32[1,32], index: 2, kind: input, shape index: {}]
  %s3 = inlined_call_operand.vmem [shape: f32[10,32], index: 3, kind: input, shape index: {}]
  %s4 = inlined_call_operand.vmem [shape: f32[1,32], index: 4, kind: input, shape index: {}]
  %s5 = inlined_call_operand.vmem [shape: f32[1,32], index: 5, kind: input, shape index: {}]
  %s6 = inlined_call_operand.vmem [shape: bf16[32,32], index: 6, kind: input, shape index: {}]
  %s7 = inlined_call_operand.vmem [shape: bf16[32,32], index: 7, kind: input, shape index: {}]
  %s8 = inlined_call_operand.vmem [shape: bf16[32,32], index: 8, kind: input, shape index: {}]
  %s9 = inlined_call_operand.vmem [shape: bf16[32,32], index: 9, kind: input, shape index: {}]
  %s10 = inlined_call_operand.vmem [shape: f32[1,32], index: 10, kind: input, shape index: {}]
  %s11 = inlined_call_operand.vmem [shape: f32[1,32], index: 11, kind: input, shape index: {}]
  %s12 = inlined_call_operand.vmem [shape: bf16[32,64], index: 12, kind: input, shape index: {}]
  %s13 = inlined_call_operand.vmem [shape: f32[1,64], index: 13, kind: input, shape index: {}]
  %s14 = inlined_call_operand.vmem [shape: bf16[64,32], index: 14, kind: input, shape index: {}]
  %s15 = inlined_call_operand.vmem [shape: f32[1,32], index: 15, kind: input, shape index: {}]
  %s16 = inlined_call_operand.vmem [shape: f32[1,32], index: 16, kind: input, shape index: {}]
  %s17 = inlined_call_operand.vmem [shape: f32[1,32], index: 17, kind: input, shape index: {}]
  %s18 = inlined_call_operand.hbm [shape: f32[10,32], index: 18, kind: output, shape index: {}]
  %s19 = sld [smem:[#allocation0]]
  $region82: #{tpu_custom_call.1} parent=0
    _
  %s21 = ssub.s32 1, %s19
  %s22 = scalar_select 0, %s21, %s19
  $region1: #{tpu_custom_call.1} parent=0
    #allocation2 [shape = 'u8[8192]{0}', space=vmem, size = 0x2000, scoped, tag = 'output window, operand 0, single buffered']
    #allocation3 [shape = 's32[1]{0}', space=sflag, size = 0x4, scoped, tag = 'scoped memory for tpu_custom_call.1']
    %23 = vsyncpa [#allocation3], 0
    // Predicated region
    $region2: #{tpu_custom_call.1} parent=1 // pred_check
      _
    $region3: #{tpu_custom_call.1} parent=1 // pred_check_branch
      %25 = sbr.rel (0) target = $region5
    $region4: #{tpu_custom_call.1} parent=1 // pred_region
      _
    $region5: #{tpu_custom_call.1} parent=1 // pred_fallthru
      _
    // Predicated region
    $region6: #{tpu_custom_call.1} parent=1 // pred_check
      _
    $region7: #{tpu_custom_call.1} parent=1 // pred_check_branch
      %27 = sbr.rel (0) target = $region9
    $region8: #{tpu_custom_call.1} parent=1 // pred_region
      _
    $region9: #{tpu_custom_call.1} parent=1 // pred_fallthru
      _
    // Predicated region
    $region10: #{tpu_custom_call.1} parent=1 // pred_check
      _
    $region11: #{tpu_custom_call.1} parent=1 // pred_check_branch
      %29 = sbr.rel (0) target = $region13
    $region12: #{tpu_custom_call.1} parent=1 // pred_region
      _
    $region13: #{tpu_custom_call.1} parent=1 // pred_fallthru
      _
    // Predicated region
    $region14: #{tpu_custom_call.1} parent=1 // pred_check
      _
    $region15: #{tpu_custom_call.1} parent=1 // pred_check_branch
      %31 = sbr.rel (0) target = $region17
    $region16: #{tpu_custom_call.1} parent=1 // pred_region
      _
    $region17: #{tpu_custom_call.1} parent=1 // pred_fallthru
      _
    // Predicated region
    $region18: #{tpu_custom_call.1} parent=1 // pred_check
      _
    $region19: #{tpu_custom_call.1} parent=1 // pred_check_branch
      %33 = sbr.rel (0) target = $region21
    $region20: #{tpu_custom_call.1} parent=1 // pred_region
      _
    $region21: #{tpu_custom_call.1} parent=1 // pred_fallthru
      _
    // Predicated region
    $region22: #{tpu_custom_call.1} parent=1 // pred_check
      _
    $region23: #{tpu_custom_call.1} parent=1 // pred_check_branch
      %35 = sbr.rel (0) target = $region25
    $region24: #{tpu_custom_call.1} parent=1 // pred_region
      _
    $region25: #{tpu_custom_call.1} parent=1 // pred_fallthru
      _
    // Predicated region
    $region26: #{tpu_custom_call.1} parent=1 // pred_check
      _
    $region27: #{tpu_custom_call.1} parent=1 // pred_check_branch
      %37 = sbr.rel (0) target = $region29
    $region28: #{tpu_custom_call.1} parent=1 // pred_region
      _
    $region29: #{tpu_custom_call.1} parent=1 // pred_fallthru
      _
    // Predicated region
    $region30: #{tpu_custom_call.1} parent=1 // pred_check
      _
    $region31: #{tpu_custom_call.1} parent=1 // pred_check_branch
      %39 = sbr.rel (0) target = $region33
    $region32: #{tpu_custom_call.1} parent=1 // pred_region
      _
    $region33: #{tpu_custom_call.1} parent=1 // pred_fallthru
      _
    // Predicated region
    $region34: #{tpu_custom_call.1} parent=1 // pred_check
      _
    $region35: #{tpu_custom_call.1} parent=1 // pred_check_branch
      %41 = sbr.rel (0) target = $region37
    $region36: #{tpu_custom_call.1} parent=1 // pred_region
      _
    $region37: #{tpu_custom_call.1} parent=1 // pred_fallthru
      _
    // Predicated region
    $region38: #{tpu_custom_call.1} parent=1 // pred_check
      _
    $region39: #{tpu_custom_call.1} parent=1 // pred_check_branch
      %43 = sbr.rel (0) target = $region41
    $region40: #{tpu_custom_call.1} parent=1 // pred_region
      _
    $region41: #{tpu_custom_call.1} parent=1 // pred_fallthru
      _
    // Predicated region
    $region42: #{tpu_custom_call.1} parent=1 // pred_check
      _
    $region43: #{tpu_custom_call.1} parent=1 // pred_check_branch
      %45 = sbr.rel (0) target = $region45
    $region44: #{tpu_custom_call.1} parent=1 // pred_region
      _
    $region45: #{tpu_custom_call.1} parent=1 // pred_fallthru
      _
    // Predicated region
    $region46: #{tpu_custom_call.1} parent=1 // pred_check
      _
    $region47: #{tpu_custom_call.1} parent=1 // pred_check_branch
      %47 = sbr.rel (0) target = $region49
    $region48: #{tpu_custom_call.1} parent=1 // pred_region
      _
    $region49: #{tpu_custom_call.1} parent=1 // pred_fallthru
      _
    // Predicated region
    $region50: #{tpu_custom_call.1} parent=1 // pred_check
      _
    $region51: #{tpu_custom_call.1} parent=1 // pred_check_branch
      %49 = sbr.rel (0) target = $region53
    $region52: #{tpu_custom_call.1} parent=1 // pred_region
      _
    $region53: #{tpu_custom_call.1} parent=1 // pred_fallthru
      _
    // Predicated region
    $region54: #{tpu_custom_call.1} parent=1 // pred_check
      _
    $region55: #{tpu_custom_call.1} parent=1 // pred_check_branch
      %51 = sbr.rel (0) target = $region57
    $region56: #{tpu_custom_call.1} parent=1 // pred_region
      _
    $region57: #{tpu_custom_call.1} parent=1 // pred_fallthru
      _
    // Predicated region
    $region58: #{tpu_custom_call.1} parent=1 // pred_check
      _
    $region59: #{tpu_custom_call.1} parent=1 // pred_check_branch
      %53 = sbr.rel (0) target = $region61
    $region60: #{tpu_custom_call.1} parent=1 // pred_region
      _
    $region61: #{tpu_custom_call.1} parent=1 // pred_fallthru
      _
    // Predicated region
    $region62: #{tpu_custom_call.1} parent=1 // pred_check
      _
    $region63: #{tpu_custom_call.1} parent=1 // pred_check_branch
      %55 = sbr.rel (0) target = $region65
    $region64: #{tpu_custom_call.1} parent=1 // pred_region
      _
    $region65: #{tpu_custom_call.1} parent=1 // pred_fallthru
      _
    // Predicated region
    $region66: #{tpu_custom_call.1} parent=1 // pred_check
      _
    $region67: #{tpu_custom_call.1} parent=1 // pred_check_branch
      %57 = sbr.rel (0) target = $region69
    $region68: #{tpu_custom_call.1} parent=1 // pred_region
      _
    $region69: #{tpu_custom_call.1} parent=1 // pred_fallthru
      _
    // Predicated region
    $region70: #{tpu_custom_call.1} parent=1 // pred_check
      _
    $region71: #{tpu_custom_call.1} parent=1 // pred_check_branch
      %59 = sbr.rel (0) target = $region73
    $region72: #{tpu_custom_call.1} parent=1 // pred_region
      _
    $region73: #{tpu_custom_call.1} parent=1 // pred_fallthru
      _
    %v61 = vld [vmem:[%s4] sm:$0x1]
    %v62 = vld [vmem:[%s5] sm:$0x1]
    %v63 = vld [vmem:[%s6] sm:$0xf]
    %v64 = vld [vmem:[%s6 + $0x4] sm:$0xf]
    %v65 = vld [vmem:[%s6 + $0x8] sm:$0xf]
    %v66 = vld [vmem:[%s6 + $0xc] sm:$0xf]
    %v67 = vld [vmem:[%s7] sm:$0xf]
    %v68 = vld [vmem:[%s7 + $0x4] sm:$0xf]
    %v69 = vld [vmem:[%s7 + $0x8] sm:$0xf]
    %v70 = vld [vmem:[%s7 + $0xc] sm:$0xf]
    %v71 = vld [vmem:[%s8] sm:$0xf]
    %v72 = vld [vmem:[%s8 + $0x4] sm:$0xf]
    %v73 = vld [vmem:[%s8 + $0x8] sm:$0xf]
    %v74 = vld [vmem:[%s8 + $0xc] sm:$0xf]
    %v75 = vld [vmem:[%s9] sm:$0xf]
    %v76 = vld [vmem:[%s9 + $0x4] sm:$0xf]
    %v77 = vld [vmem:[%s9 + $0x8] sm:$0xf]
    %v78 = vld [vmem:[%s9 + $0xc] sm:$0xf]
    %v79 = vld [vmem:[%s10] sm:$0x1]
    %v80 = vld [vmem:[%s11] sm:$0x1]
    %v81 = vld [vmem:[%s12] sm:$0xf]
    %v82 = vld [vmem:[%s12 + $0x4] sm:$0xf]
    %v83 = vld [vmem:[%s12 + $0x8] sm:$0xf]
    %v84 = vld [vmem:[%s12 + $0xc] sm:$0xf]
    %v85 = vld [vmem:[%s13] sm:$0x1]
    %v86 = vld [vmem:[%s14] sm:$0xf]
    %v87 = vld [vmem:[%s14 + $0x4] sm:$0xf]
    %v88 = vld [vmem:[%s14 + $0x8] sm:$0xf]
    %v89 = vld [vmem:[%s14 + $0xc] sm:$0xf]
    %v90 = vld [vmem:[%s14 + $0x10] sm:$0xf]
    %v91 = vld [vmem:[%s14 + $0x14] sm:$0xf]
    %v92 = vld [vmem:[%s14 + $0x18] sm:$0xf]
    %v93 = vld [vmem:[%s14 + $0x1c] sm:$0xf]
    %v94 = vld [vmem:[%s15] sm:$0x1]
    %v95 = vld [vmem:[%s16] sm:$0x1]
    %v96 = vld [vmem:[%s17] sm:$0x1]
    %v97 = vld [vmem:[%s0] sm:$0xff]
    %v98 = vld [vmem:[%s0 + $0x8] sm:$0x11]
    %v99 = vld [vmem:[%s1] sm:$0xf]
    %v100 = vld [vmem:[%s1 + $0x4] sm:$0xf]
    %v101 = vld [vmem:[%s1 + $0x8] sm:$0xf]
    %v102 = vld [vmem:[%s1 + $0xc] sm:$0xf]
    %v103 = vld [vmem:[%s1 + $0x10] sm:$0xf]
    %v104 = vld [vmem:[%s1 + $0x14] sm:$0xf]
    %v105 = vld [vmem:[%s1 + $0x18] sm:$0xf]
    %v106 = vld [vmem:[%s1 + $0x1c] sm:$0xf]
    %v107 = vld [vmem:[%s1 + $0x20] sm:$0xf]
    %v108 = vld [vmem:[%s1 + $0x24] sm:$0xf]
    %v109 = vld [vmem:[%s1 + $0x28] sm:$0xf]
    %v110 = vld [vmem:[%s1 + $0x2c] sm:$0xf]
    %v111 = vld [vmem:[%s1 + $0x30] sm:$0xf]
    %v112 = vld [vmem:[%s1 + $0x34] sm:$0xf]
    %v113 = vld [vmem:[%s1 + $0x38] sm:$0xf]
    %v114 = vld [vmem:[%s1 + $0x3c] sm:$0xf]
    %v115 = vld [vmem:[%s1 + $0x40] sm:$0xf]
    %v116 = vld [vmem:[%s1 + $0x44] sm:$0xf]
    %v117 = vld [vmem:[%s1 + $0x48] sm:$0xf]
    %v118 = vld [vmem:[%s1 + $0x4c] sm:$0xf]
    %v119 = vld [vmem:[%s1 + $0x50] sm:$0xf]
    %v120 = vld [vmem:[%s1 + $0x54] sm:$0xf]
    %v121 = vld [vmem:[%s1 + $0x58] sm:$0xf]
    %v122 = vld [vmem:[%s1 + $0x5c] sm:$0xf]
    %v123 = vld [vmem:[%s1 + $0x60] sm:$0xf]
    %v124 = vld [vmem:[%s1 + $0x64] sm:$0xf]
    %v125 = vld [vmem:[%s1 + $0x68] sm:$0xf]
    %v126 = vld [vmem:[%s1 + $0x6c] sm:$0xf]
    %v127 = vld [vmem:[%s1 + $0x70] sm:$0xf]
    %v128 = vld [vmem:[%s1 + $0x74] sm:$0xf]
    %v129 = vld [vmem:[%s1 + $0x78] sm:$0xf]
    %v130 = vld [vmem:[%s1 + $0x7c] sm:$0xf]
    %v131 = vld [vmem:[%s2] sm:$0x1]
    %v133 = vlaneseq
    %v134 = vshrl.u32 %v133, 7
    %v135 = vsub.s32 0, %v134
    %v136 = vrot.slane %v131, %v135
    %v140 = vunpack.c.l.b16 %v97
    %v141 = vunpack.c.h.b16 %v97
    %v142 = vunpack.c.l.b16 %v98
    %v143 = vunpack.c.h.b16 %v98
    %v144 = vpack.c.b16 %v142, %v140
    %v145 = vpack.c.b16 %v143, %v141
    %v180 = vunpack.c.l.b16 %v99
    %v181 = vunpack.c.l.b16 %v100
    %v182 = vunpack.c.l.b16 %v101
    %v183 = vunpack.c.l.b16 %v102
    %v184 = vunpack.c.l.b16 %v103
    %v185 = vunpack.c.l.b16 %v104
    %v186 = vunpack.c.l.b16 %v105
    %v187 = vunpack.c.l.b16 %v106
    %v188 = vunpack.c.l.b16 %v107
    %v189 = vunpack.c.l.b16 %v108
    %v190 = vunpack.c.l.b16 %v109
    %v191 = vunpack.c.l.b16 %v110
    %v192 = vunpack.c.l.b16 %v111
    %v193 = vunpack.c.l.b16 %v112
    %v194 = vunpack.c.l.b16 %v113
    %v195 = vunpack.c.l.b16 %v114
    %v196 = vunpack.c.l.b16 %v115
    %v197 = vunpack.c.l.b16 %v116
    %v198 = vunpack.c.l.b16 %v117
    %v199 = vunpack.c.l.b16 %v118
    %v200 = vunpack.c.l.b16 %v119
    %v201 = vunpack.c.l.b16 %v120
    %v202 = vunpack.c.l.b16 %v121
    %v203 = vunpack.c.l.b16 %v122
    %v204 = vunpack.c.l.b16 %v123
    %v205 = vunpack.c.l.b16 %v124
    %v206 = vunpack.c.l.b16 %v125
    %v207 = vunpack.c.l.b16 %v126
    %v208 = vunpack.c.l.b16 %v127
    %v209 = vunpack.c.l.b16 %v128
    %v210 = vunpack.c.l.b16 %v129
    %v211 = vunpack.c.l.b16 %v130
    %v212 = vpack.c.b16 %v181, %v180
    %v213 = vpack.c.b16 %v183, %v182
    %v214 = vpack.c.b16 %v185, %v184
    %v215 = vpack.c.b16 %v187, %v186
    %v216 = vpack.c.b16 %v189, %v188
    %v217 = vpack.c.b16 %v191, %v190
    %v218 = vpack.c.b16 %v193, %v192
    %v219 = vpack.c.b16 %v195, %v194
    %v220 = vpack.c.b16 %v197, %v196
    %v221 = vpack.c.b16 %v199, %v198
    %v222 = vpack.c.b16 %v201, %v200
    %v223 = vpack.c.b16 %v203, %v202
    %v224 = vpack.c.b16 %v205, %v204
    %v225 = vpack.c.b16 %v207, %v206
    %v226 = vpack.c.b16 %v209, %v208
    %v227 = vpack.c.b16 %v211, %v210
    %244 = vmatprep.subr.bf16.mxu0 0
    %245 = vmatpush1.bf16.msra.mxu0 %v212
    %246 = vmatprep.subr.bf16.mxu0 0
    %247 = vmatpush1.bf16.msra.mxu0 %v213
    %248 = vmatprep.subr.bf16.mxu0 0
    %249 = vmatpush1.bf16.msra.mxu0 %v214
    %250 = vmatprep.subr.bf16.mxu0 0
    %251 = vmatpush1.bf16.msra.mxu0 %v215
    %252 = vmatprep.subr.bf16.mxu0 0
    %253 = vmatpush1.bf16.msra.mxu0 %v216
    %254 = vmatprep.subr.bf16.mxu0 0
    %255 = vmatpush1.bf16.msra.mxu0 %v217
    %256 = vmatprep.subr.bf16.mxu0 0
    %257 = vmatpush1.bf16.msra.mxu0 %v218
    %258 = vmatprep.subr.bf16.mxu0 0
    %259 = vmatpush1.bf16.msra.mxu0 %v219
    %260 = vmatprep.subr.bf16.mxu0 0
    %261 = vmatpush1.bf16.msra.mxu0 %v220
    %262 = vmatprep.subr.bf16.mxu0 0
    %263 = vmatpush1.bf16.msra.mxu0 %v221
    %264 = vmatprep.subr.bf16.mxu0 0
    %265 = vmatpush1.bf16.msra.mxu0 %v222
    %266 = vmatprep.subr.bf16.mxu0 0
    %267 = vmatpush1.bf16.msra.mxu0 %v223
    %268 = vmatprep.subr.bf16.mxu0 0
    %269 = vmatpush1.bf16.msra.mxu0 %v224
    %270 = vmatprep.subr.bf16.mxu0 0
    %271 = vmatpush1.bf16.msra.mxu0 %v225
    %272 = vmatprep.subr.bf16.mxu0 0
    %273 = vmatpush1.bf16.msra.mxu0 %v226
    %274 = vmatprep.subr.bf16.mxu0 0
    %275 = vmatpush1.bf16.msra.mxu0 %v227
    %276 = vmatprep.mubr.bf16.mxu0 %v145
    %277 = vmatmul.mubr.bf16.gmra.mrb[0].mxu0 %v144
    %v278 = vpop.f32.mrb[0].mxu0
    %v279 = vadd.f32 %v136, %v278
    %v280 = vpop.f32.mrb[0].mxu0
    %v281 = vpop.f32.mrb[0].mxu0
    %v282 = vadd.f32 %v136, %v281
    %v283 = vpop.f32.mrb[0].mxu0
    %284 = vdwg.mxu0
    %v285 = vld [vmem:[%s3] sm:$0xff]
    %v286 = vld [vmem:[%s3 + $0x8] sm:$0x3]
    %v287 = vadd.f32 %v279, %v285
    %v288 = vadd.f32 %v282, %v286
    %vm289 = vcmask 261120
    %v290 = vsel %vm289, %v287, 0.0
    %291 = vadd.xlane.f32.xlu0 %v290
    %v292 = vpop.xlane.xlu0 %291
    %vm293 = vcmask 254976
    %v294 = vsel %vm293, %v288, 0.0
    %295 = vadd.xlane.f32.xlu0 %v294
    %v296 = vpop.xlane.xlu0 %295
    %v297 = vrcp.pop 32.0
    %v298 = vmul.f32 %v292, %v297
    %v299 = vmul.f32 %v296, %v297
    %v300 = vsub.f32 %v287, %v298
    %v301 = vsub.f32 %v288, %v299
    %v302 = vmul.f32 %v300, %v300
    %v303 = vmul.f32 %v301, %v301
    %v304 = vsel %vm289, %v302, 0.0
    %305 = vadd.xlane.f32.xlu0 %v304
    %v306 = vpop.xlane.xlu0 %305
    %v307 = vsel %vm293, %v303, 0.0
    %308 = vadd.xlane.f32.xlu0 %v307
    %v309 = vpop.xlane.xlu0 %308
    %v310 = vmul.f32 %v306, %v297
    %v311 = vmul.f32 %v309, %v297
    %v312 = vadd.f32 %v310, 1e-05
    %v313 = vadd.f32 %v311, 1e-05
    %v314 = vrsqrt.pop %v312
    %v315 = vrsqrt.pop %v313
    %v316 = vmul.f32 %v300, %v314
    %v317 = vmul.f32 %v301, %v315
    %v319 = vlaneseq
    %v320 = vshrl.u32 %v319, 7
    %v321 = vsub.s32 0, %v320
    %v322 = vrot.slane %v61, %v321
    %v324 = vmul.f32 %v316, %v322
    %v325 = vmul.f32 %v317, %v322
    %v327 = vlaneseq
    %v328 = vshrl.u32 %v327, 7
    %v329 = vsub.s32 0, %v328
    %v330 = vrot.slane %v62, %v329
    %v332 = vadd.f32 %v324, %v330
    %v333 = vadd.f32 %v325, %v330
    %v334 = vpack.c.bf16 %v333, %v332
    %v339 = vunpack.c.l.b16 %v63
    %v340 = vunpack.c.l.b16 %v64
    %v341 = vunpack.c.l.b16 %v65
    %v342 = vunpack.c.l.b16 %v66
    %v343 = vpack.c.b16 %v340, %v339
    %v344 = vpack.c.b16 %v342, %v341
    %v348 = vsel %vm289, %v334, 0
    %350 = vmatprep.subr.bf16.mxu0 0
    %351 = vmatpush1.bf16.msra.mxu0 %v343
    %352 = vmatprep.subr.bf16.mxu0 0
    %353 = vmatpush1.bf16.msra.mxu0 %v344
    %354 = vmatprep.subr.bf16.mxu0 0
    %355 = vmatpush1.bf16.msra.mxu0 0
    %356 = vmatprep.subr.bf16.mxu0 0
    %357 = vmatpush1.bf16.msra.mxu0 0
    %358 = vmatprep.subr.bf16.mxu0 0
    %359 = vmatpush1.bf16.msra.mxu0 0
    %360 = vmatprep.subr.bf16.mxu0 0
    %361 = vmatpush1.bf16.msra.mxu0 0
    %362 = vmatprep.subr.bf16.mxu0 0
    %363 = vmatpush1.bf16.msra.mxu0 0
    %364 = vmatprep.subr.bf16.mxu0 0
    %365 = vmatpush1.bf16.msra.mxu0 0
    %366 = vmatprep.subr.bf16.mxu0 0
    %367 = vmatpush1.bf16.msra.mxu0 0
    %368 = vmatprep.subr.bf16.mxu0 0
    %369 = vmatpush1.bf16.msra.mxu0 0
    %370 = vmatprep.subr.bf16.mxu0 0
    %371 = vmatpush1.bf16.msra.mxu0 0
    %372 = vmatprep.subr.bf16.mxu0 0
    %373 = vmatpush1.bf16.msra.mxu0 0
    %374 = vmatprep.subr.bf16.mxu0 0
    %375 = vmatpush1.bf16.msra.mxu0 0
    %376 = vmatprep.subr.bf16.mxu0 0
    %377 = vmatpush1.bf16.msra.mxu0 0
    %378 = vmatprep.subr.bf16.mxu0 0
    %379 = vmatpush1.bf16.msra.mxu0 0
    %380 = vmatprep.subr.bf16.mxu0 0
    %381 = vmatpush1.bf16.msra.mxu0 0
    %382 = vmatprep.mubr.bf16.mxu0 0
    %383 = vmatmul.mubr.bf16.gmra.mrb[0].mxu0 %v348
    %v384 = vpop.f32.mrb[0].mxu0
    %v385 = vadd.f32 0.0, %v384
    %v386 = vpop.f32.mrb[0].mxu0
    %v387 = vpop.f32.mrb[0].mxu0
    %v388 = vadd.f32 0.0, %v387
    %v389 = vpop.f32.mrb[0].mxu0
    %390 = vdwg.mxu0
    %v393 = vcombine.high %v385, %v385
    %v395 = vunpack.c.l.s4 1966171168
    %v396 = vunpack.c.0.s8 %v395
    %v397 = vlaneseq
    %v398 = vshrl.u32 %v397, 7
    %v399 = vsub.s32 %v396, %v398
    %v400 = vrot.slane %v385, %v399
    %v402 = vunpack.c.l.s4 1966171168
    %v403 = vunpack.c.0.s8 %v402
    %v404 = vlaneseq
    %v405 = vshrl.u32 %v404, 7
    %v406 = vsub.s32 %v403, %v405
    %v407 = vrot.slane %v393, %v406
    %v408 = vcombine.high %v400, %v400
    %v409 = vcombine.high %v407, %v407
    %v411 = vunpack.c.l.s4 1966171168
    %v412 = vunpack.c.0.s8 %v411
    %v413 = vlaneseq
    %v414 = vshrl.u32 %v413, 7
    %v415 = vsub.s32 %v412, %v414
    %v416 = vrot.slane %v400, %v415
    %v418 = vunpack.c.l.s4 1966171168
    %v419 = vunpack.c.0.s8 %v418
    %v420 = vlaneseq
    %v421 = vshrl.u32 %v420, 7
    %v422 = vsub.s32 %v419, %v421
    %v423 = vrot.slane %v407, %v422
    %v425 = vunpack.c.l.s4 1966171168
    %v426 = vunpack.c.0.s8 %v425
    %v427 = vlaneseq
    %v428 = vshrl.u32 %v427, 7
    %v429 = vsub.s32 %v426, %v428
    %v430 = vrot.slane %v408, %v429
    %v432 = vunpack.c.l.s4 1966171168
    %v433 = vunpack.c.0.s8 %v432
    %v434 = vlaneseq
    %v435 = vshrl.u32 %v434, 7
    %v436 = vsub.s32 %v433, %v435
    %v437 = vrot.slane %v409, %v436
    %v438 = vcombine.high %v416, %v416
    %v439 = vcombine.high %v423, %v423
    %v440 = vcombine.high %v430, %v430
    %v441 = vcombine.high %v437, %v437
    %v443 = vunpack.c.l.s4 1966171168
    %v444 = vunpack.c.0.s8 %v443
    %v445 = vlaneseq
    %v446 = vshrl.u32 %v445, 7
    %v447 = vsub.s32 %v444, %v446
    %v448 = vrot.slane %v388, %v447
    %v449 = vcombine.high %v448, %v448
    %v451 = vunpack.c.l.s4 1966171168
    %v452 = vunpack.c.0.s8 %v451
    %v453 = vlaneseq
    %v454 = vshrl.u32 %v453, 7
    %v455 = vsub.s32 %v452, %v454
    %v456 = vrot.slane %v448, %v455
    %v458 = vunpack.c.l.s4 1966171168
    %v459 = vunpack.c.0.s8 %v458
    %v460 = vlaneseq
    %v461 = vshrl.u32 %v460, 7
    %v462 = vsub.s32 %v459, %v461
    %v463 = vrot.slane %v449, %v462
    %v468 = vunpack.c.l.b16 %v67
    %v469 = vunpack.c.l.b16 %v68
    %v470 = vunpack.c.l.b16 %v69
    %v471 = vunpack.c.l.b16 %v70
    %v472 = vpack.c.b16 %v469, %v468
    %v473 = vpack.c.b16 %v471, %v470
    %476 = vmatprep.subr.bf16.mxu0 0
    %477 = vmatpush1.bf16.msra.mxu0 %v472
    %478 = vmatprep.subr.bf16.mxu0 0
    %479 = vmatpush1.bf16.msra.mxu0 %v473
    %480 = vmatprep.subr.bf16.mxu0 0
    %481 = vmatpush1.bf16.msra.mxu0 0
    %482 = vmatprep.subr.bf16.mxu0 0
    %483 = vmatpush1.bf16.msra.mxu0 0
    %484 = vmatprep.subr.bf16.mxu0 0
    %485 = vmatpush1.bf16.msra.mxu0 0
    %486 = vmatprep.subr.bf16.mxu0 0
    %487 = vmatpush1.bf16.msra.mxu0 0
    %488 = vmatprep.subr.bf16.mxu0 0
    %489 = vmatpush1.bf16.msra.mxu0 0
    %490 = vmatprep.subr.bf16.mxu0 0
    %491 = vmatpush1.bf16.msra.mxu0 0
    %492 = vmatprep.subr.bf16.mxu0 0
    %493 = vmatpush1.bf16.msra.mxu0 0
    %494 = vmatprep.subr.bf16.mxu0 0
    %495 = vmatpush1.bf16.msra.mxu0 0
    %496 = vmatprep.subr.bf16.mxu0 0
    %497 = vmatpush1.bf16.msra.mxu0 0
    %498 = vmatprep.subr.bf16.mxu0 0
    %499 = vmatpush1.bf16.msra.mxu0 0
    %500 = vmatprep.subr.bf16.mxu0 0
    %501 = vmatpush1.bf16.msra.mxu0 0
    %502 = vmatprep.subr.bf16.mxu0 0
    %503 = vmatpush1.bf16.msra.mxu0 0
    %504 = vmatprep.subr.bf16.mxu0 0
    %505 = vmatpush1.bf16.msra.mxu0 0
    %506 = vmatprep.subr.bf16.mxu0 0
    %507 = vmatpush1.bf16.msra.mxu0 0
    %508 = vmatprep.mubr.bf16.mxu0 0
    %509 = vmatmul.mubr.bf16.gmra.mrb[0].mxu0 %v348
    %v510 = vpop.f32.mrb[0].mxu0
    %v511 = vadd.f32 0.0, %v510
    %v512 = vpop.f32.mrb[0].mxu0
    %v513 = vpop.f32.mrb[0].mxu0
    %v514 = vadd.f32 0.0, %v513
    %v515 = vpop.f32.mrb[0].mxu0
    %516 = vdwg.mxu0
    %v519 = vcombine.high %v511, %v511
    %v521 = vunpack.c.l.s4 1966171168
    %v522 = vunpack.c.0.s8 %v521
    %v523 = vlaneseq
    %v524 = vshrl.u32 %v523, 7
    %v525 = vsub.s32 %v522, %v524
    %v526 = vrot.slane %v511, %v525
    %v528 = vunpack.c.l.s4 1966171168
    %v529 = vunpack.c.0.s8 %v528
    %v530 = vlaneseq
    %v531 = vshrl.u32 %v530, 7
    %v532 = vsub.s32 %v529, %v531
    %v533 = vrot.slane %v519, %v532
    %v534 = vcombine.high %v526, %v526
    %v535 = vcombine.high %v533, %v533
    %v537 = vunpack.c.l.s4 1966171168
    %v538 = vunpack.c.0.s8 %v537
    %v539 = vlaneseq
    %v540 = vshrl.u32 %v539, 7
    %v541 = vsub.s32 %v538, %v540
    %v542 = vrot.slane %v526, %v541
    %v544 = vunpack.c.l.s4 1966171168
    %v545 = vunpack.c.0.s8 %v544
    %v546 = vlaneseq
    %v547 = vshrl.u32 %v546, 7
    %v548 = vsub.s32 %v545, %v547
    %v549 = vrot.slane %v533, %v548
    %v551 = vunpack.c.l.s4 1966171168
    %v552 = vunpack.c.0.s8 %v551
    %v553 = vlaneseq
    %v554 = vshrl.u32 %v553, 7
    %v555 = vsub.s32 %v552, %v554
    %v556 = vrot.slane %v534, %v555
    %v558 = vunpack.c.l.s4 1966171168
    %v559 = vunpack.c.0.s8 %v558
    %v560 = vlaneseq
    %v561 = vshrl.u32 %v560, 7
    %v562 = vsub.s32 %v559, %v561
    %v563 = vrot.slane %v535, %v562
    %v564 = vcombine.high %v542, %v542
    %v565 = vcombine.high %v549, %v549
    %v566 = vcombine.high %v556, %v556
    %v567 = vcombine.high %v563, %v563
    %v569 = vunpack.c.l.s4 1966171168
    %v570 = vunpack.c.0.s8 %v569
    %v571 = vlaneseq
    %v572 = vshrl.u32 %v571, 7
    %v573 = vsub.s32 %v570, %v572
    %v574 = vrot.slane %v514, %v573
    %v575 = vcombine.high %v574, %v574
    %v577 = vunpack.c.l.s4 1966171168
    %v578 = vunpack.c.0.s8 %v577
    %v579 = vlaneseq
    %v580 = vshrl.u32 %v579, 7
    %v581 = vsub.s32 %v578, %v580
    %v582 = vrot.slane %v574, %v581
    %v584 = vunpack.c.l.s4 1966171168
    %v585 = vunpack.c.0.s8 %v584
    %v586 = vlaneseq
    %v587 = vshrl.u32 %v586, 7
    %v588 = vsub.s32 %v585, %v587
    %v589 = vrot.slane %v575, %v588
    %v594 = vunpack.c.l.b16 %v71
    %v595 = vunpack.c.l.b16 %v72
    %v596 = vunpack.c.l.b16 %v73
    %v597 = vunpack.c.l.b16 %v74
    %v598 = vpack.c.b16 %v595, %v594
    %v599 = vpack.c.b16 %v597, %v596
    %602 = vmatprep.subr.bf16.mxu0 0
    %603 = vmatpush1.bf16.msra.mxu0 %v598
    %604 = vmatprep.subr.bf16.mxu0 0
    %605 = vmatpush1.bf16.msra.mxu0 %v599
    %606 = vmatprep.subr.bf16.mxu0 0
    %607 = vmatpush1.bf16.msra.mxu0 0
    %608 = vmatprep.subr.bf16.mxu0 0
    %609 = vmatpush1.bf16.msra.mxu0 0
    %610 = vmatprep.subr.bf16.mxu0 0
    %611 = vmatpush1.bf16.msra.mxu0 0
    %612 = vmatprep.subr.bf16.mxu0 0
    %613 = vmatpush1.bf16.msra.mxu0 0
    %614 = vmatprep.subr.bf16.mxu0 0
    %615 = vmatpush1.bf16.msra.mxu0 0
    %616 = vmatprep.subr.bf16.mxu0 0
    %617 = vmatpush1.bf16.msra.mxu0 0
    %618 = vmatprep.subr.bf16.mxu0 0
    %619 = vmatpush1.bf16.msra.mxu0 0
    %620 = vmatprep.subr.bf16.mxu0 0
    %621 = vmatpush1.bf16.msra.mxu0 0
    %622 = vmatprep.subr.bf16.mxu0 0
    %623 = vmatpush1.bf16.msra.mxu0 0
    %624 = vmatprep.subr.bf16.mxu0 0
    %625 = vmatpush1.bf16.msra.mxu0 0
    %626 = vmatprep.subr.bf16.mxu0 0
    %627 = vmatpush1.bf16.msra.mxu0 0
    %628 = vmatprep.subr.bf16.mxu0 0
    %629 = vmatpush1.bf16.msra.mxu0 0
    %630 = vmatprep.subr.bf16.mxu0 0
    %631 = vmatpush1.bf16.msra.mxu0 0
    %632 = vmatprep.subr.bf16.mxu0 0
    %633 = vmatpush1.bf16.msra.mxu0 0
    %634 = vmatprep.mubr.bf16.mxu0 0
    %635 = vmatmul.mubr.bf16.gmra.mrb[0].mxu0 %v348
    %v636 = vpop.f32.mrb[0].mxu0
    %v637 = vadd.f32 0.0, %v636
    %v638 = vpop.f32.mrb[0].mxu0
    %v639 = vpop.f32.mrb[0].mxu0
    %v640 = vadd.f32 0.0, %v639
    %v641 = vpop.f32.mrb[0].mxu0
    %642 = vdwg.mxu0
    %v645 = vcombine.high %v637, %v637
    %v647 = vunpack.c.l.s4 1966171168
    %v648 = vunpack.c.0.s8 %v647
    %v649 = vlaneseq
    %v650 = vshrl.u32 %v649, 7
    %v651 = vsub.s32 %v648, %v650
    %v652 = vrot.slane %v637, %v651
    %v654 = vunpack.c.l.s4 1966171168
    %v655 = vunpack.c.0.s8 %v654
    %v656 = vlaneseq
    %v657 = vshrl.u32 %v656, 7
    %v658 = vsub.s32 %v655, %v657
    %v659 = vrot.slane %v645, %v658
    %v660 = vcombine.high %v652, %v652
    %v661 = vcombine.high %v659, %v659
    %v663 = vunpack.c.l.s4 1966171168
    %v664 = vunpack.c.0.s8 %v663
    %v665 = vlaneseq
    %v666 = vshrl.u32 %v665, 7
    %v667 = vsub.s32 %v664, %v666
    %v668 = vrot.slane %v652, %v667
    %v670 = vunpack.c.l.s4 1966171168
    %v671 = vunpack.c.0.s8 %v670
    %v672 = vlaneseq
    %v673 = vshrl.u32 %v672, 7
    %v674 = vsub.s32 %v671, %v673
    %v675 = vrot.slane %v659, %v674
    %v677 = vunpack.c.l.s4 1966171168
    %v678 = vunpack.c.0.s8 %v677
    %v679 = vlaneseq
    %v680 = vshrl.u32 %v679, 7
    %v681 = vsub.s32 %v678, %v680
    %v682 = vrot.slane %v660, %v681
    %v684 = vunpack.c.l.s4 1966171168
    %v685 = vunpack.c.0.s8 %v684
    %v686 = vlaneseq
    %v687 = vshrl.u32 %v686, 7
    %v688 = vsub.s32 %v685, %v687
    %v689 = vrot.slane %v661, %v688
    %v690 = vcombine.high %v668, %v668
    %v691 = vcombine.high %v675, %v675
    %v692 = vcombine.high %v682, %v682
    %v693 = vcombine.high %v689, %v689
    %v695 = vunpack.c.l.s4 1966171168
    %v696 = vunpack.c.0.s8 %v695
    %v697 = vlaneseq
    %v698 = vshrl.u32 %v697, 7
    %v699 = vsub.s32 %v696, %v698
    %v700 = vrot.slane %v640, %v699
    %v701 = vcombine.high %v700, %v700
    %v703 = vunpack.c.l.s4 1966171168
    %v704 = vunpack.c.0.s8 %v703
    %v705 = vlaneseq
    %v706 = vshrl.u32 %v705, 7
    %v707 = vsub.s32 %v704, %v706
    %v708 = vrot.slane %v700, %v707
    %v710 = vunpack.c.l.s4 1966171168
    %v711 = vunpack.c.0.s8 %v710
    %v712 = vlaneseq
    %v713 = vshrl.u32 %v712, 7
    %v714 = vsub.s32 %v711, %v713
    %v715 = vrot.slane %v701, %v714
    %v716 = vcombine.low %v416, %v430
    %v717 = vcombine.low %v438, %v440
    %v719 = vunpack.c.l.s4 1966171168
    %v720 = vunpack.c.0.s8 %v719
    %v721 = vlaneseq
    %v722 = vshrl.u32 %v721, 7
    %v723 = vsub.s32 %v720, %v722
    %v724 = vrot.slane %v716, %v723
    %v726 = vunpack.c.l.s4 1966171168
    %v727 = vunpack.c.0.s8 %v726
    %v728 = vlaneseq
    %v729 = vshrl.u32 %v728, 7
    %v730 = vsub.s32 %v727, %v729
    %v731 = vrot.slane %v717, %v730
    %v733 = vunpack.c.l.s4 1966171168
    %v734 = vunpack.c.0.s8 %v733
    %v735 = vlaneseq
    %v736 = vshrl.u32 %v735, 7
    %v737 = vsub.s32 %v734, %v736
    %v738 = vrot.slane %v423, %v737
    %v739 = vcombine.low %v724, %v731
    %v741 = vunpack.c.l.s4 1966171168
    %v742 = vunpack.c.0.s8 %v741
    %v743 = vlaneseq
    %v744 = vshrl.u32 %v743, 7
    %v745 = vsub.s32 %v742, %v744
    %v746 = vrot.slane %v739, %v745
    %v748 = vunpack.c.l.s4 1966171168
    %v749 = vunpack.c.0.s8 %v748
    %v750 = vlaneseq
    %v751 = vshrl.u32 %v750, 7
    %v752 = vsub.s32 %v749, %v751
    %v753 = vrot.slane %v738, %v752
    %v754 = vcombine.low %v746, %v753
    %v755 = vcombine.low %v542, %v556
    %v756 = vcombine.low %v564, %v566
    %v758 = vunpack.c.l.s4 1966171168
    %v759 = vunpack.c.0.s8 %v758
    %v760 = vlaneseq
    %v761 = vshrl.u32 %v760, 7
    %v762 = vsub.s32 %v759, %v761
    %v763 = vrot.slane %v755, %v762
    %v765 = vunpack.c.l.s4 1966171168
    %v766 = vunpack.c.0.s8 %v765
    %v767 = vlaneseq
    %v768 = vshrl.u32 %v767, 7
    %v769 = vsub.s32 %v766, %v768
    %v770 = vrot.slane %v756, %v769
    %v772 = vunpack.c.l.s4 1966171168
    %v773 = vunpack.c.0.s8 %v772
    %v774 = vlaneseq
    %v775 = vshrl.u32 %v774, 7
    %v776 = vsub.s32 %v773, %v775
    %v777 = vrot.slane %v549, %v776
    %v778 = vcombine.low %v763, %v770
    %v780 = vunpack.c.l.s4 1966171168
    %v781 = vunpack.c.0.s8 %v780
    %v782 = vlaneseq
    %v783 = vshrl.u32 %v782, 7
    %v784 = vsub.s32 %v781, %v783
    %v785 = vrot.slane %v778, %v784
    %v787 = vunpack.c.l.s4 1966171168
    %v788 = vunpack.c.0.s8 %v787
    %v789 = vlaneseq
    %v790 = vshrl.u32 %v789, 7
    %v791 = vsub.s32 %v788, %v790
    %v792 = vrot.slane %v777, %v791
    %v793 = vcombine.low %v785, %v792
    %vm794 = vcmask 130048
    %v795 = vsel %vm794, %v754, 0
    %v797 = vsel %vm794, %v793, 0
    %799 = vmatprep.subr.mxu0 0.0
    %800 = vmatpush1.xpose.msra.mxu0 %v797
    %801 = vmatprep.subr.mxu0 0.0
    %802 = vmatpush1.xpose.msra.mxu0 0.0
    %803 = vmatprep.subr.mxu0 0.0
    %804 = vmatpush1.xpose.msra.mxu0 0.0
    %805 = vmatprep.subr.mxu0 0.0
    %806 = vmatpush1.xpose.msra.mxu0 0.0
    %807 = vmatprep.subr.mxu0 0.0
    %808 = vmatpush1.xpose.msra.mxu0 0.0
    %809 = vmatprep.subr.mxu0 0.0
    %810 = vmatpush1.xpose.msra.mxu0 0.0
    %811 = vmatprep.subr.mxu0 0.0
    %812 = vmatpush1.xpose.msra.mxu0 0.0
    %813 = vmatprep.subr.mxu0 0.0
    %814 = vmatpush1.xpose.msra.mxu0 0.0
    %815 = vmatprep.subr.mxu0 0.0
    %816 = vmatpush1.xpose.msra.mxu0 0.0
    %817 = vmatprep.subr.mxu0 0.0
    %818 = vmatpush1.xpose.msra.mxu0 0.0
    %819 = vmatprep.subr.mxu0 0.0
    %820 = vmatpush1.xpose.msra.mxu0 0.0
    %821 = vmatprep.subr.mxu0 0.0
    %822 = vmatpush1.xpose.msra.mxu0 0.0
    %823 = vmatprep.subr.mxu0 0.0
    %824 = vmatpush1.xpose.msra.mxu0 0.0
    %825 = vmatprep.subr.mxu0 0.0
    %826 = vmatpush1.xpose.msra.mxu0 0.0
    %827 = vmatprep.subr.mxu0 0.0
    %828 = vmatpush1.xpose.msra.mxu0 0.0
    %829 = vmatprep.subr.mxu0 0.0
    %830 = vmatpush1.xpose.msra.mxu0 0.0
    %831 = vmatprep.subr.mxu0 0.0
    %832 = vmatpush1.xpose.msra.mxu0 0.0
    %833 = vmatprep.subr.mxu0 0.0
    %834 = vmatpush1.xpose.msra.mxu0 0.0
    %835 = vmatprep.subr.mxu0 0.0
    %836 = vmatpush1.xpose.msra.mxu0 0.0
    %837 = vmatprep.subr.mxu0 0.0
    %838 = vmatpush1.xpose.msra.mxu0 0.0
    %839 = vmatprep.subr.mxu0 0.0
    %840 = vmatpush1.xpose.msra.mxu0 0.0
    %841 = vmatprep.subr.mxu0 0.0
    %842 = vmatpush1.xpose.msra.mxu0 0.0
    %843 = vmatprep.subr.mxu0 0.0
    %844 = vmatpush1.xpose.msra.mxu0 0.0
    %845 = vmatprep.subr.mxu0 0.0
    %846 = vmatpush1.xpose.msra.mxu0 0.0
    %847 = vmatprep.subr.mxu0 0.0
    %848 = vmatpush1.xpose.msra.mxu0 0.0
    %849 = vmatprep.subr.mxu0 0.0
    %850 = vmatpush1.xpose.msra.mxu0 0.0
    %851 = vmatprep.subr.mxu0 0.0
    %852 = vmatpush1.xpose.msra.mxu0 0.0
    %853 = vmatprep.subr.mxu0 0.0
    %854 = vmatpush1.xpose.msra.mxu0 0.0
    %855 = vmatprep.subr.mxu0 0.0
    %856 = vmatpush1.xpose.msra.mxu0 0.0
    %857 = vmatprep.subr.mxu0 0.0
    %858 = vmatpush1.xpose.msra.mxu0 0.0
    %859 = vmatprep.subr.mxu0 0.0
    %860 = vmatpush1.xpose.msra.mxu0 0.0
    %861 = vmatprep.subr.mxu0 0.0
    %862 = vmatpush1.xpose.msra.mxu0 0.0
    %863 = vmatprep.mubr.f32.mxu0 0.0
    %864 = vmatmul.mubr.f32.gmra.mrb[0].mxu0 %v795
    %v865 = vpop.f32.mrb[0].mxu0
    %v866 = vadd.f32 0.0, %v865
    %v867 = vpop.f32.mrb[0].mxu0
    %868 = vdwg.mxu0
    %v869 = vcombine.low %v437, %v439
    %v870 = vcombine.low %v441, %v456
    %v872 = vunpack.c.l.s4 1966171168
    %v873 = vunpack.c.0.s8 %v872
    %v874 = vlaneseq
    %v875 = vshrl.u32 %v874, 7
    %v876 = vsub.s32 %v873, %v875
    %v877 = vrot.slane %v869, %v876
    %v879 = vunpack.c.l.s4 1966171168
    %v880 = vunpack.c.0.s8 %v879
    %v881 = vlaneseq
    %v882 = vshrl.u32 %v881, 7
    %v883 = vsub.s32 %v880, %v882
    %v884 = vrot.slane %v870, %v883
    %v886 = vunpack.c.l.s4 1966171168
    %v887 = vunpack.c.0.s8 %v886
    %v888 = vlaneseq
    %v889 = vshrl.u32 %v888, 7
    %v890 = vsub.s32 %v887, %v889
    %v891 = vrot.slane %v463, %v890
    %v892 = vcombine.low %v877, %v884
    %v894 = vunpack.c.l.s4 1966171168
    %v895 = vunpack.c.0.s8 %v894
    %v896 = vlaneseq
    %v897 = vshrl.u32 %v896, 7
    %v898 = vsub.s32 %v895, %v897
    %v899 = vrot.slane %v892, %v898
    %v901 = vunpack.c.l.s4 1966171168
    %v902 = vunpack.c.0.s8 %v901
    %v903 = vlaneseq
    %v904 = vshrl.u32 %v903, 7
    %v905 = vsub.s32 %v902, %v904
    %v906 = vrot.slane %v891, %v905
    %v907 = vcombine.low %v899, %v906
    %v908 = vcombine.low %v563, %v565
    %v909 = vcombine.low %v567, %v582
    %v911 = vunpack.c.l.s4 1966171168
    %v912 = vunpack.c.0.s8 %v911
    %v913 = vlaneseq
    %v914 = vshrl.u32 %v913, 7
    %v915 = vsub.s32 %v912, %v914
    %v916 = vrot.slane %v908, %v915
    %v918 = vunpack.c.l.s4 1966171168
    %v919 = vunpack.c.0.s8 %v918
    %v920 = vlaneseq
    %v921 = vshrl.u32 %v920, 7
    %v922 = vsub.s32 %v919, %v921
    %v923 = vrot.slane %v909, %v922
    %v925 = vunpack.c.l.s4 1966171168
    %v926 = vunpack.c.0.s8 %v925
    %v927 = vlaneseq
    %v928 = vshrl.u32 %v927, 7
    %v929 = vsub.s32 %v926, %v928
    %v930 = vrot.slane %v589, %v929
    %v931 = vcombine.low %v916, %v923
    %v933 = vunpack.c.l.s4 1966171168
    %v934 = vunpack.c.0.s8 %v933
    %v935 = vlaneseq
    %v936 = vshrl.u32 %v935, 7
    %v937 = vsub.s32 %v934, %v936
    %v938 = vrot.slane %v931, %v937
    %v940 = vunpack.c.l.s4 1966171168
    %v941 = vunpack.c.0.s8 %v940
    %v942 = vlaneseq
    %v943 = vshrl.u32 %v942, 7
    %v944 = vsub.s32 %v941, %v943
    %v945 = vrot.slane %v930, %v944
    %v946 = vcombine.low %v938, %v945
    %v947 = vsel %vm794, %v907, 0
    %v949 = vsel %vm794, %v946, 0
    %951 = vmatprep.subr.mxu0 0.0
    %952 = vmatpush1.xpose.msra.mxu0 %v949
    %953 = vmatprep.subr.mxu0 0.0
    %954 = vmatpush1.xpose.msra.mxu0 0.0
    %955 = vmatprep.subr.mxu0 0.0
    %956 = vmatpush1.xpose.msra.mxu0 0.0
    %957 = vmatprep.subr.mxu0 0.0
    %958 = vmatpush1.xpose.msra.mxu0 0.0
    %959 = vmatprep.subr.mxu0 0.0
    %960 = vmatpush1.xpose.msra.mxu0 0.0
    %961 = vmatprep.subr.mxu0 0.0
    %962 = vmatpush1.xpose.msra.mxu0 0.0
    %963 = vmatprep.subr.mxu0 0.0
    %964 = vmatpush1.xpose.msra.mxu0 0.0
    %965 = vmatprep.subr.mxu0 0.0
    %966 = vmatpush1.xpose.msra.mxu0 0.0
    %967 = vmatprep.subr.mxu0 0.0
    %968 = vmatpush1.xpose.msra.mxu0 0.0
    %969 = vmatprep.subr.mxu0 0.0
    %970 = vmatpush1.xpose.msra.mxu0 0.0
    %971 = vmatprep.subr.mxu0 0.0
    %972 = vmatpush1.xpose.msra.mxu0 0.0
    %973 = vmatprep.subr.mxu0 0.0
    %974 = vmatpush1.xpose.msra.mxu0 0.0
    %975 = vmatprep.subr.mxu0 0.0
    %976 = vmatpush1.xpose.msra.mxu0 0.0
    %977 = vmatprep.subr.mxu0 0.0
    %978 = vmatpush1.xpose.msra.mxu0 0.0
    %979 = vmatprep.subr.mxu0 0.0
    %980 = vmatpush1.xpose.msra.mxu0 0.0
    %981 = vmatprep.subr.mxu0 0.0
    %982 = vmatpush1.xpose.msra.mxu0 0.0
    %983 = vmatprep.subr.mxu0 0.0
    %984 = vmatpush1.xpose.msra.mxu0 0.0
    %985 = vmatprep.subr.mxu0 0.0
    %986 = vmatpush1.xpose.msra.mxu0 0.0
    %987 = vmatprep.subr.mxu0 0.0
    %988 = vmatpush1.xpose.msra.mxu0 0.0
    %989 = vmatprep.subr.mxu0 0.0
    %990 = vmatpush1.xpose.msra.mxu0 0.0
    %991 = vmatprep.subr.mxu0 0.0
    %992 = vmatpush1.xpose.msra.mxu0 0.0
    %993 = vmatprep.subr.mxu0 0.0
    %994 = vmatpush1.xpose.msra.mxu0 0.0
    %995 = vmatprep.subr.mxu0 0.0
    %996 = vmatpush1.xpose.msra.mxu0 0.0
    %997 = vmatprep.subr.mxu0 0.0
    %998 = vmatpush1.xpose.msra.mxu0 0.0
    %999 = vmatprep.subr.mxu0 0.0
    %1000 = vmatpush1.xpose.msra.mxu0 0.0
    %1001 = vmatprep.subr.mxu0 0.0
    %1002 = vmatpush1.xpose.msra.mxu0 0.0
    %1003 = vmatprep.subr.mxu0 0.0
    %1004 = vmatpush1.xpose.msra.mxu0 0.0
    %1005 = vmatprep.subr.mxu0 0.0
    %1006 = vmatpush1.xpose.msra.mxu0 0.0
    %1007 = vmatprep.subr.mxu0 0.0
    %1008 = vmatpush1.xpose.msra.mxu0 0.0
    %1009 = vmatprep.subr.mxu0 0.0
    %1010 = vmatpush1.xpose.msra.mxu0 0.0
    %1011 = vmatprep.subr.mxu0 0.0
    %1012 = vmatpush1.xpose.msra.mxu0 0.0
    %1013 = vmatprep.subr.mxu0 0.0
    %1014 = vmatpush1.xpose.msra.mxu0 0.0
    %1015 = vmatprep.mubr.f32.mxu0 0.0
    %1016 = vmatmul.mubr.f32.gmra.mrb[0].mxu0 %v947
    %v1017 = vpop.f32.mrb[0].mxu0
    %v1018 = vadd.f32 0.0, %v1017
    %v1019 = vpop.f32.mrb[0].mxu0
    %1020 = vdwg.mxu0
    %vm1021 = vcmask 36864
    %v1022 = vsel %vm1021, %v866, -inf
    %1023 = vmax.xlane.f32.xlu0 %v1022
    %v1024 = vpop.xlane.xlu0 %1023
    %v1025 = vsel %vm1021, %v1018, -inf
    %1026 = vmax.xlane.f32.xlu0 %v1025
    %v1027 = vpop.xlane.xlu0 %1026
    %v1028 = vsub.f32 %v866, %v1024
    %v1029 = vsub.f32 %v1018, %v1027
    %v1030 = vmul.f32 %v1028, 1.442695
    %v1031 = vpow.pop %v1030
    %v1032 = vmul.f32 %v1029, 1.442695
    %v1033 = vpow.pop %v1032
    %v1034 = vsel %vm1021, %v1031, 0.0
    %1035 = vadd.xlane.f32.xlu0 %v1034
    %v1036 = vpop.xlane.xlu0 %1035
    %v1037 = vsel %vm1021, %v1033, 0.0
    %1038 = vadd.xlane.f32.xlu0 %v1037
    %v1039 = vpop.xlane.xlu0 %1038
    %v1040 = vcombine.low %v668, %v682
    %v1041 = vcombine.low %v690, %v692
    %v1043 = vunpack.c.l.s4 1966171168
    %v1044 = vunpack.c.0.s8 %v1043
    %v1045 = vlaneseq
    %v1046 = vshrl.u32 %v1045, 7
    %v1047 = vsub.s32 %v1044, %v1046
    %v1048 = vrot.slane %v1040, %v1047
    %v1050 = vunpack.c.l.s4 1966171168
    %v1051 = vunpack.c.0.s8 %v1050
    %v1052 = vlaneseq
    %v1053 = vshrl.u32 %v1052, 7
    %v1054 = vsub.s32 %v1051, %v1053
    %v1055 = vrot.slane %v1041, %v1054
    %v1057 = vunpack.c.l.s4 1966171168
    %v1058 = vunpack.c.0.s8 %v1057
    %v1059 = vlaneseq
    %v1060 = vshrl.u32 %v1059, 7
    %v1061 = vsub.s32 %v1058, %v1060
    %v1062 = vrot.slane %v675, %v1061
    %v1063 = vcombine.low %v1048, %v1055
    %v1065 = vunpack.c.l.s4 1966171168
    %v1066 = vunpack.c.0.s8 %v1065
    %v1067 = vlaneseq
    %v1068 = vshrl.u32 %v1067, 7
    %v1069 = vsub.s32 %v1066, %v1068
    %v1070 = vrot.slane %v1063, %v1069
    %v1072 = vunpack.c.l.s4 1966171168
    %v1073 = vunpack.c.0.s8 %v1072
    %v1074 = vlaneseq
    %v1075 = vshrl.u32 %v1074, 7
    %v1076 = vsub.s32 %v1073, %v1075
    %v1077 = vrot.slane %v1062, %v1076
    %v1078 = vcombine.low %v1070, %v1077
    %vm1079 = vcmask 39936
    %v1081 = vsel %vm1079, %v1031, 0
    %vm1083 = vcmask 1044480
    %v1084 = vsel %vm1083, %v1078, 0
    %1086 = vmatprep.subr.mxu0 0.0
    %1087 = vmatpush1.msra.mxu0 %v1084
    %1088 = vmatprep.subr.mxu0 0.0
    %1089 = vmatpush1.msra.mxu0 0.0
    %1090 = vmatprep.subr.mxu0 0.0
    %1091 = vmatpush1.msra.mxu0 0.0
    %1092 = vmatprep.subr.mxu0 0.0
    %1093 = vmatpush1.msra.mxu0 0.0
    %1094 = vmatprep.subr.mxu0 0.0
    %1095 = vmatpush1.msra.mxu0 0.0
    %1096 = vmatprep.subr.mxu0 0.0
    %1097 = vmatpush1.msra.mxu0 0.0
    %1098 = vmatprep.subr.mxu0 0.0
    %1099 = vmatpush1.msra.mxu0 0.0
    %1100 = vmatprep.subr.mxu0 0.0
    %1101 = vmatpush1.msra.mxu0 0.0
    %1102 = vmatprep.subr.mxu0 0.0
    %1103 = vmatpush1.msra.mxu0 0.0
    %1104 = vmatprep.subr.mxu0 0.0
    %1105 = vmatpush1.msra.mxu0 0.0
    %1106 = vmatprep.subr.mxu0 0.0
    %1107 = vmatpush1.msra.mxu0 0.0
    %1108 = vmatprep.subr.mxu0 0.0
    %1109 = vmatpush1.msra.mxu0 0.0
    %1110 = vmatprep.subr.mxu0 0.0
    %1111 = vmatpush1.msra.mxu0 0.0
    %1112 = vmatprep.subr.mxu0 0.0
    %1113 = vmatpush1.msra.mxu0 0.0
    %1114 = vmatprep.subr.mxu0 0.0
    %1115 = vmatpush1.msra.mxu0 0.0
    %1116 = vmatprep.subr.mxu0 0.0
    %1117 = vmatpush1.msra.mxu0 0.0
    %1118 = vmatprep.subr.mxu0 0.0
    %1119 = vmatpush1.msra.mxu0 0.0
    %1120 = vmatprep.subr.mxu0 0.0
    %1121 = vmatpush1.msra.mxu0 0.0
    %1122 = vmatprep.subr.mxu0 0.0
    %1123 = vmatpush1.msra.mxu0 0.0
    %1124 = vmatprep.subr.mxu0 0.0
    %1125 = vmatpush1.msra.mxu0 0.0
    %1126 = vmatprep.subr.mxu0 0.0
    %1127 = vmatpush1.msra.mxu0 0.0
    %1128 = vmatprep.subr.mxu0 0.0
    %1129 = vmatpush1.msra.mxu0 0.0
    %1130 = vmatprep.subr.mxu0 0.0
    %1131 = vmatpush1.msra.mxu0 0.0
    %1132 = vmatprep.subr.mxu0 0.0
    %1133 = vmatpush1.msra.mxu0 0.0
    %1134 = vmatprep.subr.mxu0 0.0
    %1135 = vmatpush1.msra.mxu0 0.0
    %1136 = vmatprep.subr.mxu0 0.0
    %1137 = vmatpush1.msra.mxu0 0.0
    %1138 = vmatprep.subr.mxu0 0.0
    %1139 = vmatpush1.msra.mxu0 0.0
    %1140 = vmatprep.subr.mxu0 0.0
    %1141 = vmatpush1.msra.mxu0 0.0
    %1142 = vmatprep.subr.mxu0 0.0
    %1143 = vmatpush1.msra.mxu0 0.0
    %1144 = vmatprep.subr.mxu0 0.0
    %1145 = vmatpush1.msra.mxu0 0.0
    %1146 = vmatprep.subr.mxu0 0.0
    %1147 = vmatpush1.msra.mxu0 0.0
    %1148 = vmatprep.subr.mxu0 0.0
    %1149 = vmatpush1.msra.mxu0 0.0
    %1150 = vmatprep.mubr.f32.mxu0 0.0
    %1151 = vmatmul.mubr.f32.gmra.mrb[0].mxu0 %v1081
    %v1152 = vpop.f32.mrb[0].mxu0
    %v1153 = vadd.f32 0.0, %v1152
    %v1154 = vpop.f32.mrb[0].mxu0
    %1155 = vdwg.mxu0
    %v1156 = vcombine.low %v689, %v691
    %v1157 = vcombine.low %v693, %v708
    %v1159 = vunpack.c.l.s4 1966171168
    %v1160 = vunpack.c.0.s8 %v1159
    %v1161 = vlaneseq
    %v1162 = vshrl.u32 %v1161, 7
    %v1163 = vsub.s32 %v1160, %v1162
    %v1164 = vrot.slane %v1156, %v1163
    %v1166 = vunpack.c.l.s4 1966171168
    %v1167 = vunpack.c.0.s8 %v1166
    %v1168 = vlaneseq
    %v1169 = vshrl.u32 %v1168, 7
    %v1170 = vsub.s32 %v1167, %v1169
    %v1171 = vrot.slane %v1157, %v1170
    %v1173 = vunpack.c.l.s4 1966171168
    %v1174 = vunpack.c.0.s8 %v1173
    %v1175 = vlaneseq
    %v1176 = vshrl.u32 %v1175, 7
    %v1177 = vsub.s32 %v1174, %v1176
    %v1178 = vrot.slane %v715, %v1177
    %v1179 = vcombine.low %v1164, %v1171
    %v1181 = vunpack.c.l.s4 1966171168
    %v1182 = vunpack.c.0.s8 %v1181
    %v1183 = vlaneseq
    %v1184 = vshrl.u32 %v1183, 7
    %v1185 = vsub.s32 %v1182, %v1184
    %v1186 = vrot.slane %v1179, %v1185
    %v1188 = vunpack.c.l.s4 1966171168
    %v1189 = vunpack.c.0.s8 %v1188
    %v1190 = vlaneseq
    %v1191 = vshrl.u32 %v1190, 7
    %v1192 = vsub.s32 %v1189, %v1191
    %v1193 = vrot.slane %v1178, %v1192
    %v1194 = vcombine.low %v1186, %v1193
    %v1196 = vsel %vm1079, %v1033, 0
    %v1198 = vsel %vm1083, %v1194, 0
    %1200 = vmatprep.subr.mxu0 0.0
    %1201 = vmatpush1.msra.mxu0 %v1198
    %1202 = vmatprep.subr.mxu0 0.0
    %1203 = vmatpush1.msra.mxu0 0.0
    %1204 = vmatprep.subr.mxu0 0.0
    %1205 = vmatpush1.msra.mxu0 0.0
    %1206 = vmatprep.subr.mxu0 0.0
    %1207 = vmatpush1.msra.mxu0 0.0
    %1208 = vmatprep.subr.mxu0 0.0
    %1209 = vmatpush1.msra.mxu0 0.0
    %1210 = vmatprep.subr.mxu0 0.0
    %1211 = vmatpush1.msra.mxu0 0.0
    %1212 = vmatprep.subr.mxu0 0.0
    %1213 = vmatpush1.msra.mxu0 0.0
    %1214 = vmatprep.subr.mxu0 0.0
    %1215 = vmatpush1.msra.mxu0 0.0
    %1216 = vmatprep.subr.mxu0 0.0
    %1217 = vmatpush1.msra.mxu0 0.0
    %1218 = vmatprep.subr.mxu0 0.0
    %1219 = vmatpush1.msra.mxu0 0.0
    %1220 = vmatprep.subr.mxu0 0.0
    %1221 = vmatpush1.msra.mxu0 0.0
    %1222 = vmatprep.subr.mxu0 0.0
    %1223 = vmatpush1.msra.mxu0 0.0
    %1224 = vmatprep.subr.mxu0 0.0
    %1225 = vmatpush1.msra.mxu0 0.0
    %1226 = vmatprep.subr.mxu0 0.0
    %1227 = vmatpush1.msra.mxu0 0.0
    %1228 = vmatprep.subr.mxu0 0.0
    %1229 = vmatpush1.msra.mxu0 0.0
    %1230 = vmatprep.subr.mxu0 0.0
    %1231 = vmatpush1.msra.mxu0 0.0
    %1232 = vmatprep.subr.mxu0 0.0
    %1233 = vmatpush1.msra.mxu0 0.0
    %1234 = vmatprep.subr.mxu0 0.0
    %1235 = vmatpush1.msra.mxu0 0.0
    %1236 = vmatprep.subr.mxu0 0.0
    %1237 = vmatpush1.msra.mxu0 0.0
    %1238 = vmatprep.subr.mxu0 0.0
    %1239 = vmatpush1.msra.mxu0 0.0
    %1240 = vmatprep.subr.mxu0 0.0
    %1241 = vmatpush1.msra.mxu0 0.0
    %1242 = vmatprep.subr.mxu0 0.0
    %1243 = vmatpush1.msra.mxu0 0.0
    %1244 = vmatprep.subr.mxu0 0.0
    %1245 = vmatpush1.msra.mxu0 0.0
    %1246 = vmatprep.subr.mxu0 0.0
    %1247 = vmatpush1.msra.mxu0 0.0
    %1248 = vmatprep.subr.mxu0 0.0
    %1249 = vmatpush1.msra.mxu0 0.0
    %1250 = vmatprep.subr.mxu0 0.0
    %1251 = vmatpush1.msra.mxu0 0.0
    %1252 = vmatprep.subr.mxu0 0.0
    %1253 = vmatpush1.msra.mxu0 0.0
    %1254 = vmatprep.subr.mxu0 0.0
    %1255 = vmatpush1.msra.mxu0 0.0
    %1256 = vmatprep.subr.mxu0 0.0
    %1257 = vmatpush1.msra.mxu0 0.0
    %1258 = vmatprep.subr.mxu0 0.0
    %1259 = vmatpush1.msra.mxu0 0.0
    %1260 = vmatprep.subr.mxu0 0.0
    %1261 = vmatpush1.msra.mxu0 0.0
    %1262 = vmatprep.subr.mxu0 0.0
    %1263 = vmatpush1.msra.mxu0 0.0
    %1264 = vmatprep.mubr.f32.mxu0 0.0
    %1265 = vmatmul.mubr.f32.gmra.mrb[0].mxu0 %v1196
    %v1266 = vpop.f32.mrb[0].mxu0
    %v1267 = vadd.f32 0.0, %v1266
    %v1268 = vpop.f32.mrb[0].mxu0
    %1269 = vdwg.mxu0
    %v1270 = vrcp.pop %v1036
    %v1271 = vrcp.pop %v1039
    %v1272 = vmul.f32 %v1153, %v1270
    %v1273 = vmul.f32 %v1267, %v1271
    %v1276 = vcombine.high %v1272, %v1272
    %v1278 = vunpack.c.l.s4 1966171168
    %v1279 = vunpack.c.0.s8 %v1278
    %v1280 = vlaneseq
    %v1281 = vshrl.u32 %v1280, 7
    %v1282 = vsub.s32 %v1279, %v1281
    %v1283 = vrot.slane %v1272, %v1282
    %v1285 = vunpack.c.l.s4 1966171168
    %v1286 = vunpack.c.0.s8 %v1285
    %v1287 = vlaneseq
    %v1288 = vshrl.u32 %v1287, 7
    %v1289 = vsub.s32 %v1286, %v1288
    %v1290 = vrot.slane %v1276, %v1289
    %v1291 = vcombine.high %v1283, %v1283
    %v1293 = vunpack.c.l.s4 1966171168
    %v1294 = vunpack.c.0.s8 %v1293
    %v1295 = vlaneseq
    %v1296 = vshrl.u32 %v1295, 7
    %v1297 = vsub.s32 %v1294, %v1296
    %v1298 = vrot.slane %v1283, %v1297
    %v1300 = vunpack.c.l.s4 1966171168
    %v1301 = vunpack.c.0.s8 %v1300
    %v1302 = vlaneseq
    %v1303 = vshrl.u32 %v1302, 7
    %v1304 = vsub.s32 %v1301, %v1303
    %v1305 = vrot.slane %v1290, %v1304
    %v1307 = vunpack.c.l.s4 1966171168
    %v1308 = vunpack.c.0.s8 %v1307
    %v1309 = vlaneseq
    %v1310 = vshrl.u32 %v1309, 7
    %v1311 = vsub.s32 %v1308, %v1310
    %v1312 = vrot.slane %v1291, %v1311
    %v1313 = vcombine.high %v1298, %v1298
    %v1314 = vcombine.high %v1312, %v1312
    %v1315 = vcombine.high %v1273, %v1273
    %v1317 = vunpack.c.l.s4 1966171168
    %v1318 = vunpack.c.0.s8 %v1317
    %v1319 = vlaneseq
    %v1320 = vshrl.u32 %v1319, 7
    %v1321 = vsub.s32 %v1318, %v1320
    %v1322 = vrot.slane %v1273, %v1321
    %v1324 = vunpack.c.l.s4 1966171168
    %v1325 = vunpack.c.0.s8 %v1324
    %v1326 = vlaneseq
    %v1327 = vshrl.u32 %v1326, 7
    %v1328 = vsub.s32 %v1325, %v1327
    %v1329 = vrot.slane %v1315, %v1328
    %v1330 = vcombine.high %v1322, %v1322
    %v1332 = vunpack.c.l.s4 1966171168
    %v1333 = vunpack.c.0.s8 %v1332
    %v1334 = vlaneseq
    %v1335 = vshrl.u32 %v1334, 7
    %v1336 = vsub.s32 %v1333, %v1335
    %v1337 = vrot.slane %v1322, %v1336
    %v1339 = vunpack.c.l.s4 1966171168
    %v1340 = vunpack.c.0.s8 %v1339
    %v1341 = vlaneseq
    %v1342 = vshrl.u32 %v1341, 7
    %v1343 = vsub.s32 %v1340, %v1342
    %v1344 = vrot.slane %v1329, %v1343
    %v1346 = vunpack.c.l.s4 1966171168
    %v1347 = vunpack.c.0.s8 %v1346
    %v1348 = vlaneseq
    %v1349 = vshrl.u32 %v1348, 7
    %v1350 = vsub.s32 %v1347, %v1349
    %v1351 = vrot.slane %v1330, %v1350
    %v1352 = vcombine.high %v1337, %v1337
    %v1353 = vcombine.high %v1351, %v1351
    %v1354 = vcombine.low %v1298, %v1312
    %v1355 = vcombine.low %v1313, %v1314
    %v1356 = vcombine.low %v1305, %v1337
    %v1357 = vcombine.low %v1351, %v1352
    %v1359 = vunpack.c.l.s4 1966171168
    %v1360 = vunpack.c.0.s8 %v1359
    %v1361 = vlaneseq
    %v1362 = vshrl.u32 %v1361, 7
    %v1363 = vsub.s32 %v1360, %v1362
    %v1364 = vrot.slane %v1354, %v1363
    %v1366 = vunpack.c.l.s4 1966171168
    %v1367 = vunpack.c.0.s8 %v1366
    %v1368 = vlaneseq
    %v1369 = vshrl.u32 %v1368, 7
    %v1370 = vsub.s32 %v1367, %v1369
    %v1371 = vrot.slane %v1355, %v1370
    %v1373 = vunpack.c.l.s4 1966171168
    %v1374 = vunpack.c.0.s8 %v1373
    %v1375 = vlaneseq
    %v1376 = vshrl.u32 %v1375, 7
    %v1377 = vsub.s32 %v1374, %v1376
    %v1378 = vrot.slane %v1356, %v1377
    %v1380 = vunpack.c.l.s4 1966171168
    %v1381 = vunpack.c.0.s8 %v1380
    %v1382 = vlaneseq
    %v1383 = vshrl.u32 %v1382, 7
    %v1384 = vsub.s32 %v1381, %v1383
    %v1385 = vrot.slane %v1357, %v1384
    %v1386 = vcombine.low %v1364, %v1371
    %v1387 = vcombine.low %v1378, %v1385
    %v1389 = vunpack.c.l.s4 1966171168
    %v1390 = vunpack.c.0.s8 %v1389
    %v1391 = vlaneseq
    %v1392 = vshrl.u32 %v1391, 7
    %v1393 = vsub.s32 %v1390, %v1392
    %v1394 = vrot.slane %v1386, %v1393
    %v1396 = vunpack.c.l.s4 1966171168
    %v1397 = vunpack.c.0.s8 %v1396
    %v1398 = vlaneseq
    %v1399 = vshrl.u32 %v1398, 7
    %v1400 = vsub.s32 %v1397, %v1399
    %v1401 = vrot.slane %v1387, %v1400
    %v1402 = vcombine.low %v1394, %v1401
    %v1403 = vcombine.low %v1353, %v1344
    %v1405 = vunpack.c.l.s4 1966171168
    %v1406 = vunpack.c.0.s8 %v1405
    %v1407 = vlaneseq
    %v1408 = vshrl.u32 %v1407, 7
    %v1409 = vsub.s32 %v1406, %v1408
    %v1410 = vrot.slane %v1403, %v1409
    %v1412 = vunpack.c.l.s4 1966171168
    %v1413 = vunpack.c.0.s8 %v1412
    %v1414 = vlaneseq
    %v1415 = vshrl.u32 %v1414, 7
    %v1416 = vsub.s32 %v1413, %v1415
    %v1417 = vrot.slane %v1410, %v1416
    %v1420 = vpack.c.bf16 %v1417, %v1402
    %v1423 = vunpack.c.l.b16 %v75
    %v1424 = vunpack.c.l.b16 %v76
    %v1425 = vpack.c.b16 %v1424, %v1423
    %v1428 = vsel %vm794, %v1420, 0
    %1430 = vmatprep.subr.bf16.mxu0 0
    %1431 = vmatpush1.bf16.msra.mxu0 %v1425
    %1432 = vmatprep.subr.bf16.mxu0 0
    %1433 = vmatpush1.bf16.msra.mxu0 0
    %1434 = vmatprep.subr.bf16.mxu0 0
    %1435 = vmatpush1.bf16.msra.mxu0 0
    %1436 = vmatprep.subr.bf16.mxu0 0
    %1437 = vmatpush1.bf16.msra.mxu0 0
    %1438 = vmatprep.subr.bf16.mxu0 0
    %1439 = vmatpush1.bf16.msra.mxu0 0
    %1440 = vmatprep.subr.bf16.mxu0 0
    %1441 = vmatpush1.bf16.msra.mxu0 0
    %1442 = vmatprep.subr.bf16.mxu0 0
    %1443 = vmatpush1.bf16.msra.mxu0 0
    %1444 = vmatprep.subr.bf16.mxu0 0
    %1445 = vmatpush1.bf16.msra.mxu0 0
    %1446 = vmatprep.subr.bf16.mxu0 0
    %1447 = vmatpush1.bf16.msra.mxu0 0
    %1448 = vmatprep.subr.bf16.mxu0 0
    %1449 = vmatpush1.bf16.msra.mxu0 0
    %1450 = vmatprep.subr.bf16.mxu0 0
    %1451 = vmatpush1.bf16.msra.mxu0 0
    %1452 = vmatprep.subr.bf16.mxu0 0
    %1453 = vmatpush1.bf16.msra.mxu0 0
    %1454 = vmatprep.subr.bf16.mxu0 0
    %1455 = vmatpush1.bf16.msra.mxu0 0
    %1456 = vmatprep.subr.bf16.mxu0 0
    %1457 = vmatpush1.bf16.msra.mxu0 0
    %1458 = vmatprep.subr.bf16.mxu0 0
    %1459 = vmatpush1.bf16.msra.mxu0 0
    %1460 = vmatprep.subr.bf16.mxu0 0
    %1461 = vmatpush1.bf16.msra.mxu0 0
    %1462 = vmatprep.mubr.bf16.mxu0 0
    %1463 = vmatmul.mubr.bf16.gmra.mrb[0].mxu0 %v1428
    %v1464 = vpop.f32.mrb[0].mxu0
    %v1465 = vadd.f32 0.0, %v1464
    %v1466 = vpop.f32.mrb[0].mxu0
    %v1467 = vpop.f32.mrb[0].mxu0
    %v1468 = vadd.f32 0.0, %v1467
    %v1469 = vpop.f32.mrb[0].mxu0
    %1470 = vdwg.mxu0
    %v1471 = vadd.f32 %v287, %v1465
    %v1472 = vadd.f32 %v288, %v1468
    %1473 = vrot.lane.b32.xlu0 %v754, 112
    %v1474 = vpop.permute.xlu0 %1473
    %1475 = vrot.lane.b32.xlu0 %v793, 112
    %v1476 = vpop.permute.xlu0 %1475
    %v1477 = vsel %vm794, %v1474, 0
    %v1479 = vsel %vm794, %v1476, 0
    %1481 = vmatprep.subr.mxu0 0.0
    %1482 = vmatpush1.xpose.msra.mxu0 %v1479
    %1483 = vmatprep.subr.mxu0 0.0
    %1484 = vmatpush1.xpose.msra.mxu0 0.0
    %1485 = vmatprep.subr.mxu0 0.0
    %1486 = vmatpush1.xpose.msra.mxu0 0.0
    %1487 = vmatprep.subr.mxu0 0.0
    %1488 = vmatpush1.xpose.msra.mxu0 0.0
    %1489 = vmatprep.subr.mxu0 0.0
    %1490 = vmatpush1.xpose.msra.mxu0 0.0
    %1491 = vmatprep.subr.mxu0 0.0
    %1492 = vmatpush1.xpose.msra.mxu0 0.0
    %1493 = vmatprep.subr.mxu0 0.0
    %1494 = vmatpush1.xpose.msra.mxu0 0.0
    %1495 = vmatprep.subr.mxu0 0.0
    %1496 = vmatpush1.xpose.msra.mxu0 0.0
    %1497 = vmatprep.subr.mxu0 0.0
    %1498 = vmatpush1.xpose.msra.mxu0 0.0
    %1499 = vmatprep.subr.mxu0 0.0
    %1500 = vmatpush1.xpose.msra.mxu0 0.0
    %1501 = vmatprep.subr.mxu0 0.0
    %1502 = vmatpush1.xpose.msra.mxu0 0.0
    %1503 = vmatprep.subr.mxu0 0.0
    %1504 = vmatpush1.xpose.msra.mxu0 0.0
    %1505 = vmatprep.subr.mxu0 0.0
    %1506 = vmatpush1.xpose.msra.mxu0 0.0
    %1507 = vmatprep.subr.mxu0 0.0
    %1508 = vmatpush1.xpose.msra.mxu0 0.0
    %1509 = vmatprep.subr.mxu0 0.0
    %1510 = vmatpush1.xpose.msra.mxu0 0.0
    %1511 = vmatprep.subr.mxu0 0.0
    %1512 = vmatpush1.xpose.msra.mxu0 0.0
    %1513 = vmatprep.subr.mxu0 0.0
    %1514 = vmatpush1.xpose.msra.mxu0 0.0
    %1515 = vmatprep.subr.mxu0 0.0
    %1516 = vmatpush1.xpose.msra.mxu0 0.0
    %1517 = vmatprep.subr.mxu0 0.0
    %1518 = vmatpush1.xpose.msra.mxu0 0.0
    %1519 = vmatprep.subr.mxu0 0.0
    %1520 = vmatpush1.xpose.msra.mxu0 0.0
    %1521 = vmatprep.subr.mxu0 0.0
    %1522 = vmatpush1.xpose.msra.mxu0 0.0
    %1523 = vmatprep.subr.mxu0 0.0
    %1524 = vmatpush1.xpose.msra.mxu0 0.0
    %1525 = vmatprep.subr.mxu0 0.0
    %1526 = vmatpush1.xpose.msra.mxu0 0.0
    %1527 = vmatprep.subr.mxu0 0.0
    %1528 = vmatpush1.xpose.msra.mxu0 0.0
    %1529 = vmatprep.subr.mxu0 0.0
    %1530 = vmatpush1.xpose.msra.mxu0 0.0
    %1531 = vmatprep.subr.mxu0 0.0
    %1532 = vmatpush1.xpose.msra.mxu0 0.0
    %1533 = vmatprep.subr.mxu0 0.0
    %1534 = vmatpush1.xpose.msra.mxu0 0.0
    %1535 = vmatprep.subr.mxu0 0.0
    %1536 = vmatpush1.xpose.msra.mxu0 0.0
    %1537 = vmatprep.subr.mxu0 0.0
    %1538 = vmatpush1.xpose.msra.mxu0 0.0
    %1539 = vmatprep.subr.mxu0 0.0
    %1540 = vmatpush1.xpose.msra.mxu0 0.0
    %1541 = vmatprep.subr.mxu0 0.0
    %1542 = vmatpush1.xpose.msra.mxu0 0.0
    %1543 = vmatprep.subr.mxu0 0.0
    %1544 = vmatpush1.xpose.msra.mxu0 0.0
    %1545 = vmatprep.mubr.f32.mxu0 0.0
    %1546 = vmatmul.mubr.f32.gmra.mrb[0].mxu0 %v1477
    %v1547 = vpop.f32.mrb[0].mxu0
    %v1548 = vadd.f32 0.0, %v1547
    %v1549 = vpop.f32.mrb[0].mxu0
    %1550 = vdwg.mxu0
    %1551 = vrot.lane.b32.xlu0 %v907, 112
    %v1552 = vpop.permute.xlu0 %1551
    %1553 = vrot.lane.b32.xlu0 %v946, 112
    %v1554 = vpop.permute.xlu0 %1553
    %v1555 = vsel %vm794, %v1552, 0
    %v1557 = vsel %vm794, %v1554, 0
    %1559 = vmatprep.subr.mxu0 0.0
    %1560 = vmatpush1.xpose.msra.mxu0 %v1557
    %1561 = vmatprep.subr.mxu0 0.0
    %1562 = vmatpush1.xpose.msra.mxu0 0.0
    %1563 = vmatprep.subr.mxu0 0.0
    %1564 = vmatpush1.xpose.msra.mxu0 0.0
    %1565 = vmatprep.subr.mxu0 0.0
    %1566 = vmatpush1.xpose.msra.mxu0 0.0
    %1567 = vmatprep.subr.mxu0 0.0
    %1568 = vmatpush1.xpose.msra.mxu0 0.0
    %1569 = vmatprep.subr.mxu0 0.0
    %1570 = vmatpush1.xpose.msra.mxu0 0.0
    %1571 = vmatprep.subr.mxu0 0.0
    %1572 = vmatpush1.xpose.msra.mxu0 0.0
    %1573 = vmatprep.subr.mxu0 0.0
    %1574 = vmatpush1.xpose.msra.mxu0 0.0
    %1575 = vmatprep.subr.mxu0 0.0
    %1576 = vmatpush1.xpose.msra.mxu0 0.0
    %1577 = vmatprep.subr.mxu0 0.0
    %1578 = vmatpush1.xpose.msra.mxu0 0.0
    %1579 = vmatprep.subr.mxu0 0.0
    %1580 = vmatpush1.xpose.msra.mxu0 0.0
    %1581 = vmatprep.subr.mxu0 0.0
    %1582 = vmatpush1.xpose.msra.mxu0 0.0
    %1583 = vmatprep.subr.mxu0 0.0
    %1584 = vmatpush1.xpose.msra.mxu0 0.0
    %1585 = vmatprep.subr.mxu0 0.0
    %1586 = vmatpush1.xpose.msra.mxu0 0.0
    %1587 = vmatprep.subr.mxu0 0.0
    %1588 = vmatpush1.xpose.msra.mxu0 0.0
    %1589 = vmatprep.subr.mxu0 0.0
    %1590 = vmatpush1.xpose.msra.mxu0 0.0
    %1591 = vmatprep.subr.mxu0 0.0
    %1592 = vmatpush1.xpose.msra.mxu0 0.0
    %1593 = vmatprep.subr.mxu0 0.0
    %1594 = vmatpush1.xpose.msra.mxu0 0.0
    %1595 = vmatprep.subr.mxu0 0.0
    %1596 = vmatpush1.xpose.msra.mxu0 0.0
    %1597 = vmatprep.subr.mxu0 0.0
    %1598 = vmatpush1.xpose.msra.mxu0 0.0
    %1599 = vmatprep.subr.mxu0 0.0
    %1600 = vmatpush1.xpose.msra.mxu0 0.0
    %1601 = vmatprep.subr.mxu0 0.0
    %1602 = vmatpush1.xpose.msra.mxu0 0.0
    %1603 = vmatprep.subr.mxu0 0.0
    %1604 = vmatpush1.xpose.msra.mxu0 0.0
    %1605 = vmatprep.subr.mxu0 0.0
    %1606 = vmatpush1.xpose.msra.mxu0 0.0
    %1607 = vmatprep.subr.mxu0 0.0
    %1608 = vmatpush1.xpose.msra.mxu0 0.0
    %1609 = vmatprep.subr.mxu0 0.0
    %1610 = vmatpush1.xpose.msra.mxu0 0.0
    %1611 = vmatprep.subr.mxu0 0.0
    %1612 = vmatpush1.xpose.msra.mxu0 0.0
    %1613 = vmatprep.subr.mxu0 0.0
    %1614 = vmatpush1.xpose.msra.mxu0 0.0
    %1615 = vmatprep.subr.mxu0 0.0
    %1616 = vmatpush1.xpose.msra.mxu0 0.0
    %1617 = vmatprep.subr.mxu0 0.0
    %1618 = vmatpush1.xpose.msra.mxu0 0.0
    %1619 = vmatprep.subr.mxu0 0.0
    %1620 = vmatpush1.xpose.msra.mxu0 0.0
    %1621 = vmatprep.subr.mxu0 0.0
    %1622 = vmatpush1.xpose.msra.mxu0 0.0
    %1623 = vmatprep.mubr.f32.mxu0 0.0
    %1624 = vmatmul.mubr.f32.gmra.mrb[0].mxu0 %v1555
    %v1625 = vpop.f32.mrb[0].mxu0
    %v1626 = vadd.f32 0.0, %v1625
    %v1627 = vpop.f32.mrb[0].mxu0
    %1628 = vdwg.mxu0
    %v1629 = vsel %vm1021, %v1548, -inf
    %1630 = vmax.xlane.f32.xlu0 %v1629
    %v1631 = vpop.xlane.xlu0 %1630
    %v1632 = vsel %vm1021, %v1626, -inf
    %1633 = vmax.xlane.f32.xlu0 %v1632
    %v1634 = vpop.xlane.xlu0 %1633
    %v1635 = vsub.f32 %v1548, %v1631
    %v1636 = vsub.f32 %v1626, %v1634
    %v1637 = vmul.f32 %v1635, 1.442695
    %v1638 = vpow.pop %v1637
    %v1639 = vmul.f32 %v1636, 1.442695
    %v1640 = vpow.pop %v1639
    %v1641 = vsel %vm1021, %v1638, 0.0
    %1642 = vadd.xlane.f32.xlu0 %v1641
    %v1643 = vpop.xlane.xlu0 %1642
    %v1644 = vsel %vm1021, %v1640, 0.0
    %1645 = vadd.xlane.f32.xlu0 %v1644
    %v1646 = vpop.xlane.xlu0 %1645
    %1647 = vrot.lane.b32.xlu0 %v1078, 112
    %v1648 = vpop.permute.xlu0 %1647
    %v1650 = vsel %vm1079, %v1638, 0
    %v1652 = vsel %vm1083, %v1648, 0
    %1654 = vmatprep.subr.mxu0 0.0
    %1655 = vmatpush1.msra.mxu0 %v1652
    %1656 = vmatprep.subr.mxu0 0.0
    %1657 = vmatpush1.msra.mxu0 0.0
    %1658 = vmatprep.subr.mxu0 0.0
    %1659 = vmatpush1.msra.mxu0 0.0
    %1660 = vmatprep.subr.mxu0 0.0
    %1661 = vmatpush1.msra.mxu0 0.0
    %1662 = vmatprep.subr.mxu0 0.0
    %1663 = vmatpush1.msra.mxu0 0.0
    %1664 = vmatprep.subr.mxu0 0.0
    %1665 = vmatpush1.msra.mxu0 0.0
    %1666 = vmatprep.subr.mxu0 0.0
    %1667 = vmatpush1.msra.mxu0 0.0
    %1668 = vmatprep.subr.mxu0 0.0
    %1669 = vmatpush1.msra.mxu0 0.0
    %1670 = vmatprep.subr.mxu0 0.0
    %1671 = vmatpush1.msra.mxu0 0.0
    %1672 = vmatprep.subr.mxu0 0.0
    %1673 = vmatpush1.msra.mxu0 0.0
    %1674 = vmatprep.subr.mxu0 0.0
    %1675 = vmatpush1.msra.mxu0 0.0
    %1676 = vmatprep.subr.mxu0 0.0
    %1677 = vmatpush1.msra.mxu0 0.0
    %1678 = vmatprep.subr.mxu0 0.0
    %1679 = vmatpush1.msra.mxu0 0.0
    %1680 = vmatprep.subr.mxu0 0.0
    %1681 = vmatpush1.msra.mxu0 0.0
    %1682 = vmatprep.subr.mxu0 0.0
    %1683 = vmatpush1.msra.mxu0 0.0
    %1684 = vmatprep.subr.mxu0 0.0
    %1685 = vmatpush1.msra.mxu0 0.0
    %1686 = vmatprep.subr.mxu0 0.0
    %1687 = vmatpush1.msra.mxu0 0.0
    %1688 = vmatprep.subr.mxu0 0.0
    %1689 = vmatpush1.msra.mxu0 0.0
    %1690 = vmatprep.subr.mxu0 0.0
    %1691 = vmatpush1.msra.mxu0 0.0
    %1692 = vmatprep.subr.mxu0 0.0
    %1693 = vmatpush1.msra.mxu0 0.0
    %1694 = vmatprep.subr.mxu0 0.0
    %1695 = vmatpush1.msra.mxu0 0.0
    %1696 = vmatprep.subr.mxu0 0.0
    %1697 = vmatpush1.msra.mxu0 0.0
    %1698 = vmatprep.subr.mxu0 0.0
    %1699 = vmatpush1.msra.mxu0 0.0
    %1700 = vmatprep.subr.mxu0 0.0
    %1701 = vmatpush1.msra.mxu0 0.0
    %1702 = vmatprep.subr.mxu0 0.0
    %1703 = vmatpush1.msra.mxu0 0.0
    %1704 = vmatprep.subr.mxu0 0.0
    %1705 = vmatpush1.msra.mxu0 0.0
    %1706 = vmatprep.subr.mxu0 0.0
    %1707 = vmatpush1.msra.mxu0 0.0
    %1708 = vmatprep.subr.mxu0 0.0
    %1709 = vmatpush1.msra.mxu0 0.0
    %1710 = vmatprep.subr.mxu0 0.0
    %1711 = vmatpush1.msra.mxu0 0.0
    %1712 = vmatprep.subr.mxu0 0.0
    %1713 = vmatpush1.msra.mxu0 0.0
    %1714 = vmatprep.subr.mxu0 0.0
    %1715 = vmatpush1.msra.mxu0 0.0
    %1716 = vmatprep.subr.mxu0 0.0
    %1717 = vmatpush1.msra.mxu0 0.0
    %1718 = vmatprep.mubr.f32.mxu0 0.0
    %1719 = vmatmul.mubr.f32.gmra.mrb[0].mxu0 %v1650
    %v1720 = vpop.f32.mrb[0].mxu0
    %v1721 = vadd.f32 0.0, %v1720
    %v1722 = vpop.f32.mrb[0].mxu0
    %1723 = vdwg.mxu0
    %1724 = vrot.lane.b32.xlu0 %v1194, 112
    %v1725 = vpop.permute.xlu0 %1724
    %v1727 = vsel %vm1079, %v1640, 0
    %v1729 = vsel %vm1083, %v1725, 0
    %1731 = vmatprep.subr.mxu0 0.0
    %1732 = vmatpush1.msra.mxu0 %v1729
    %1733 = vmatprep.subr.mxu0 0.0
    %1734 = vmatpush1.msra.mxu0 0.0
    %1735 = vmatprep.subr.mxu0 0.0
    %1736 = vmatpush1.msra.mxu0 0.0
    %1737 = vmatprep.subr.mxu0 0.0
    %1738 = vmatpush1.msra.mxu0 0.0
    %1739 = vmatprep.subr.mxu0 0.0
    %1740 = vmatpush1.msra.mxu0 0.0
    %1741 = vmatprep.subr.mxu0 0.0
    %1742 = vmatpush1.msra.mxu0 0.0
    %1743 = vmatprep.subr.mxu0 0.0
    %1744 = vmatpush1.msra.mxu0 0.0
    %1745 = vmatprep.subr.mxu0 0.0
    %1746 = vmatpush1.msra.mxu0 0.0
    %1747 = vmatprep.subr.mxu0 0.0
    %1748 = vmatpush1.msra.mxu0 0.0
    %1749 = vmatprep.subr.mxu0 0.0
    %1750 = vmatpush1.msra.mxu0 0.0
    %1751 = vmatprep.subr.mxu0 0.0
    %1752 = vmatpush1.msra.mxu0 0.0
    %1753 = vmatprep.subr.mxu0 0.0
    %1754 = vmatpush1.msra.mxu0 0.0
    %1755 = vmatprep.subr.mxu0 0.0
    %1756 = vmatpush1.msra.mxu0 0.0
    %1757 = vmatprep.subr.mxu0 0.0
    %1758 = vmatpush1.msra.mxu0 0.0
    %1759 = vmatprep.subr.mxu0 0.0
    %1760 = vmatpush1.msra.mxu0 0.0
    %1761 = vmatprep.subr.mxu0 0.0
    %1762 = vmatpush1.msra.mxu0 0.0
    %1763 = vmatprep.subr.mxu0 0.0
    %1764 = vmatpush1.msra.mxu0 0.0
    %1765 = vmatprep.subr.mxu0 0.0
    %1766 = vmatpush1.msra.mxu0 0.0
    %1767 = vmatprep.subr.mxu0 0.0
    %1768 = vmatpush1.msra.mxu0 0.0
    %1769 = vmatprep.subr.mxu0 0.0
    %1770 = vmatpush1.msra.mxu0 0.0
    %1771 = vmatprep.subr.mxu0 0.0
    %1772 = vmatpush1.msra.mxu0 0.0
    %1773 = vmatprep.subr.mxu0 0.0
    %1774 = vmatpush1.msra.mxu0 0.0
    %1775 = vmatprep.subr.mxu0 0.0
    %1776 = vmatpush1.msra.mxu0 0.0
    %1777 = vmatprep.subr.mxu0 0.0
    %1778 = vmatpush1.msra.mxu0 0.0
    %1779 = vmatprep.subr.mxu0 0.0
    %1780 = vmatpush1.msra.mxu0 0.0
    %1781 = vmatprep.subr.mxu0 0.0
    %1782 = vmatpush1.msra.mxu0 0.0
    %1783 = vmatprep.subr.mxu0 0.0
    %1784 = vmatpush1.msra.mxu0 0.0
    %1785 = vmatprep.subr.mxu0 0.0
    %1786 = vmatpush1.msra.mxu0 0.0
    %1787 = vmatprep.subr.mxu0 0.0
    %1788 = vmatpush1.msra.mxu0 0.0
    %1789 = vmatprep.subr.mxu0 0.0
    %1790 = vmatpush1.msra.mxu0 0.0
    %1791 = vmatprep.subr.mxu0 0.0
    %1792 = vmatpush1.msra.mxu0 0.0
    %1793 = vmatprep.subr.mxu0 0.0
    %1794 = vmatpush1.msra.mxu0 0.0
    %1795 = vmatprep.mubr.f32.mxu0 0.0
    %1796 = vmatmul.mubr.f32.gmra.mrb[0].mxu0 %v1727
    %v1797 = vpop.f32.mrb[0].mxu0
    %v1798 = vadd.f32 0.0, %v1797
    %v1799 = vpop.f32.mrb[0].mxu0
    %1800 = vdwg.mxu0
    %v1801 = vrcp.pop %v1643
    %v1802 = vrcp.pop %v1646
    %v1803 = vmul.f32 %v1721, %v1801
    %v1804 = vmul.f32 %v1798, %v1802
    %v1807 = vcombine.high %v1803, %v1803
    %v1809 = vunpack.c.l.s4 1966171168
    %v1810 = vunpack.c.0.s8 %v1809
    %v1811 = vlaneseq
    %v1812 = vshrl.u32 %v1811, 7
    %v1813 = vsub.s32 %v1810, %v1812
    %v1814 = vrot.slane %v1803, %v1813
    %v1816 = vunpack.c.l.s4 1966171168
    %v1817 = vunpack.c.0.s8 %v1816
    %v1818 = vlaneseq
    %v1819 = vshrl.u32 %v1818, 7
    %v1820 = vsub.s32 %v1817, %v1819
    %v1821 = vrot.slane %v1807, %v1820
    %v1822 = vcombine.high %v1814, %v1814
    %v1824 = vunpack.c.l.s4 1966171168
    %v1825 = vunpack.c.0.s8 %v1824
    %v1826 = vlaneseq
    %v1827 = vshrl.u32 %v1826, 7
    %v1828 = vsub.s32 %v1825, %v1827
    %v1829 = vrot.slane %v1814, %v1828
    %v1831 = vunpack.c.l.s4 1966171168
    %v1832 = vunpack.c.0.s8 %v1831
    %v1833 = vlaneseq
    %v1834 = vshrl.u32 %v1833, 7
    %v1835 = vsub.s32 %v1832, %v1834
    %v1836 = vrot.slane %v1821, %v1835
    %v1838 = vunpack.c.l.s4 1966171168
    %v1839 = vunpack.c.0.s8 %v1838
    %v1840 = vlaneseq
    %v1841 = vshrl.u32 %v1840, 7
    %v1842 = vsub.s32 %v1839, %v1841
    %v1843 = vrot.slane %v1822, %v1842
    %v1844 = vcombine.high %v1829, %v1829
    %v1845 = vcombine.high %v1843, %v1843
    %v1846 = vcombine.high %v1804, %v1804
    %v1848 = vunpack.c.l.s4 1966171168
    %v1849 = vunpack.c.0.s8 %v1848
    %v1850 = vlaneseq
    %v1851 = vshrl.u32 %v1850, 7
    %v1852 = vsub.s32 %v1849, %v1851
    %v1853 = vrot.slane %v1804, %v1852
    %v1855 = vunpack.c.l.s4 1966171168
    %v1856 = vunpack.c.0.s8 %v1855
    %v1857 = vlaneseq
    %v1858 = vshrl.u32 %v1857, 7
    %v1859 = vsub.s32 %v1856, %v1858
    %v1860 = vrot.slane %v1846, %v1859
    %v1861 = vcombine.high %v1853, %v1853
    %v1863 = vunpack.c.l.s4 1966171168
    %v1864 = vunpack.c.0.s8 %v1863
    %v1865 = vlaneseq
    %v1866 = vshrl.u32 %v1865, 7
    %v1867 = vsub.s32 %v1864, %v1866
    %v1868 = vrot.slane %v1853, %v1867
    %v1870 = vunpack.c.l.s4 1966171168
    %v1871 = vunpack.c.0.s8 %v1870
    %v1872 = vlaneseq
    %v1873 = vshrl.u32 %v1872, 7
    %v1874 = vsub.s32 %v1871, %v1873
    %v1875 = vrot.slane %v1860, %v1874
    %v1877 = vunpack.c.l.s4 1966171168
    %v1878 = vunpack.c.0.s8 %v1877
    %v1879 = vlaneseq
    %v1880 = vshrl.u32 %v1879, 7
    %v1881 = vsub.s32 %v1878, %v1880
    %v1882 = vrot.slane %v1861, %v1881
    %v1883 = vcombine.high %v1868, %v1868
    %v1884 = vcombine.high %v1882, %v1882
    %v1885 = vcombine.low %v1829, %v1843
    %v1886 = vcombine.low %v1844, %v1845
    %v1887 = vcombine.low %v1836, %v1868
    %v1888 = vcombine.low %v1882, %v1883
    %v1890 = vunpack.c.l.s4 1966171168
    %v1891 = vunpack.c.0.s8 %v1890
    %v1892 = vlaneseq
    %v1893 = vshrl.u32 %v1892, 7
    %v1894 = vsub.s32 %v1891, %v1893
    %v1895 = vrot.slane %v1885, %v1894
    %v1897 = vunpack.c.l.s4 1966171168
    %v1898 = vunpack.c.0.s8 %v1897
    %v1899 = vlaneseq
    %v1900 = vshrl.u32 %v1899, 7
    %v1901 = vsub.s32 %v1898, %v1900
    %v1902 = vrot.slane %v1886, %v1901
    %v1904 = vunpack.c.l.s4 1966171168
    %v1905 = vunpack.c.0.s8 %v1904
    %v1906 = vlaneseq
    %v1907 = vshrl.u32 %v1906, 7
    %v1908 = vsub.s32 %v1905, %v1907
    %v1909 = vrot.slane %v1887, %v1908
    %v1911 = vunpack.c.l.s4 1966171168
    %v1912 = vunpack.c.0.s8 %v1911
    %v1913 = vlaneseq
    %v1914 = vshrl.u32 %v1913, 7
    %v1915 = vsub.s32 %v1912, %v1914
    %v1916 = vrot.slane %v1888, %v1915
    %v1917 = vcombine.low %v1895, %v1902
    %v1918 = vcombine.low %v1909, %v1916
    %v1920 = vunpack.c.l.s4 1966171168
    %v1921 = vunpack.c.0.s8 %v1920
    %v1922 = vlaneseq
    %v1923 = vshrl.u32 %v1922, 7
    %v1924 = vsub.s32 %v1921, %v1923
    %v1925 = vrot.slane %v1917, %v1924
    %v1927 = vunpack.c.l.s4 1966171168
    %v1928 = vunpack.c.0.s8 %v1927
    %v1929 = vlaneseq
    %v1930 = vshrl.u32 %v1929, 7
    %v1931 = vsub.s32 %v1928, %v1930
    %v1932 = vrot.slane %v1918, %v1931
    %v1933 = vcombine.low %v1925, %v1932
    %v1934 = vcombine.low %v1884, %v1875
    %v1936 = vunpack.c.l.s4 1966171168
    %v1937 = vunpack.c.0.s8 %v1936
    %v1938 = vlaneseq
    %v1939 = vshrl.u32 %v1938, 7
    %v1940 = vsub.s32 %v1937, %v1939
    %v1941 = vrot.slane %v1934, %v1940
    %v1943 = vunpack.c.l.s4 1966171168
    %v1944 = vunpack.c.0.s8 %v1943
    %v1945 = vlaneseq
    %v1946 = vshrl.u32 %v1945, 7
    %v1947 = vsub.s32 %v1944, %v1946
    %v1948 = vrot.slane %v1941, %v1947
    %v1951 = vpack.c.bf16 %v1948, %v1933
    %v1954 = vunpack.c.l.b16 %v77
    %v1955 = vunpack.c.l.b16 %v78
    %v1956 = vpack.c.b16 %v1955, %v1954
    %v1959 = vsel %vm794, %v1951, 0
    %1961 = vmatprep.subr.bf16.mxu0 0
    %1962 = vmatpush1.bf16.msra.mxu0 %v1956
    %1963 = vmatprep.subr.bf16.mxu0 0
    %1964 = vmatpush1.bf16.msra.mxu0 0
    %1965 = vmatprep.subr.bf16.mxu0 0
    %1966 = vmatpush1.bf16.msra.mxu0 0
    %1967 = vmatprep.subr.bf16.mxu0 0
    %1968 = vmatpush1.bf16.msra.mxu0 0
    %1969 = vmatprep.subr.bf16.mxu0 0
    %1970 = vmatpush1.bf16.msra.mxu0 0
    %1971 = vmatprep.subr.bf16.mxu0 0
    %1972 = vmatpush1.bf16.msra.mxu0 0
    %1973 = vmatprep.subr.bf16.mxu0 0
    %1974 = vmatpush1.bf16.msra.mxu0 0
    %1975 = vmatprep.subr.bf16.mxu0 0
    %1976 = vmatpush1.bf16.msra.mxu0 0
    %1977 = vmatprep.subr.bf16.mxu0 0
    %1978 = vmatpush1.bf16.msra.mxu0 0
    %1979 = vmatprep.subr.bf16.mxu0 0
    %1980 = vmatpush1.bf16.msra.mxu0 0
    %1981 = vmatprep.subr.bf16.mxu0 0
    %1982 = vmatpush1.bf16.msra.mxu0 0
    %1983 = vmatprep.subr.bf16.mxu0 0
    %1984 = vmatpush1.bf16.msra.mxu0 0
    %1985 = vmatprep.subr.bf16.mxu0 0
    %1986 = vmatpush1.bf16.msra.mxu0 0
    %1987 = vmatprep.subr.bf16.mxu0 0
    %1988 = vmatpush1.bf16.msra.mxu0 0
    %1989 = vmatprep.subr.bf16.mxu0 0
    %1990 = vmatpush1.bf16.msra.mxu0 0
    %1991 = vmatprep.subr.bf16.mxu0 0
    %1992 = vmatpush1.bf16.msra.mxu0 0
    %1993 = vmatprep.mubr.bf16.mxu0 0
    %1994 = vmatmul.mubr.bf16.gmra.mrb[0].mxu0 %v1959
    %v1995 = vpop.f32.mrb[0].mxu0
    %v1996 = vadd.f32 0.0, %v1995
    %v1997 = vpop.f32.mrb[0].mxu0
    %v1998 = vpop.f32.mrb[0].mxu0
    %v1999 = vadd.f32 0.0, %v1998
    %v2000 = vpop.f32.mrb[0].mxu0
    %2001 = vdwg.mxu0
    %v2002 = vadd.f32 %v1471, %v1996
    %v2003 = vadd.f32 %v1472, %v1999
    %v2004 = vsel %vm289, %v2002, 0.0
    %2005 = vadd.xlane.f32.xlu0 %v2004
    %v2006 = vpop.xlane.xlu0 %2005
    %v2007 = vsel %vm293, %v2003, 0.0
    %2008 = vadd.xlane.f32.xlu0 %v2007
    %v2009 = vpop.xlane.xlu0 %2008
    %v2010 = vmul.f32 %v2006, %v297
    %v2011 = vmul.f32 %v2009, %v297
    %v2012 = vsub.f32 %v2002, %v2010
    %v2013 = vsub.f32 %v2003, %v2011
    %v2014 = vmul.f32 %v2012, %v2012
    %v2015 = vmul.f32 %v2013, %v2013
    %v2016 = vsel %vm289, %v2014, 0.0
    %2017 = vadd.xlane.f32.xlu0 %v2016
    %v2018 = vpop.xlane.xlu0 %2017
    %v2019 = vsel %vm293, %v2015, 0.0
    %2020 = vadd.xlane.f32.xlu0 %v2019
    %v2021 = vpop.xlane.xlu0 %2020
    %v2022 = vmul.f32 %v2018, %v297
    %v2023 = vmul.f32 %v2021, %v297
    %v2024 = vadd.f32 %v2022, 1e-05
    %v2025 = vadd.f32 %v2023, 1e-05
    %v2026 = vrsqrt.pop %v2024
    %v2027 = vrsqrt.pop %v2025
    %v2028 = vmul.f32 %v2012, %v2026
    %v2029 = vmul.f32 %v2013, %v2027
    %v2031 = vlaneseq
    %v2032 = vshrl.u32 %v2031, 7
    %v2033 = vsub.s32 0, %v2032
    %v2034 = vrot.slane %v79, %v2033
    %v2036 = vmul.f32 %v2028, %v2034
    %v2037 = vmul.f32 %v2029, %v2034
    %v2039 = vlaneseq
    %v2040 = vshrl.u32 %v2039, 7
    %v2041 = vsub.s32 0, %v2040
    %v2042 = vrot.slane %v80, %v2041
    %v2044 = vadd.f32 %v2036, %v2042
    %v2045 = vadd.f32 %v2037, %v2042
    %v2046 = vpack.c.bf16 %v2045, %v2044
    %v2048 = vlaneseq
    %v2049 = vshrl.u32 %v2048, 7
    %v2050 = vsub.s32 0, %v2049
    %v2051 = vrot.slane %v85, %v2050
    %v2057 = vunpack.c.l.b16 %v81
    %v2058 = vunpack.c.l.b16 %v82
    %v2059 = vunpack.c.l.b16 %v83
    %v2060 = vunpack.c.l.b16 %v84
    %v2061 = vpack.c.b16 %v2058, %v2057
    %v2062 = vpack.c.b16 %v2060, %v2059
    %v2066 = vsel %vm289, %v2046, 0
    %2068 = vmatprep.subr.bf16.mxu0 0
    %2069 = vmatpush1.bf16.msra.mxu0 %v2061
    %2070 = vmatprep.subr.bf16.mxu0 0
    %2071 = vmatpush1.bf16.msra.mxu0 %v2062
    %2072 = vmatprep.subr.bf16.mxu0 0
    %2073 = vmatpush1.bf16.msra.mxu0 0
    %2074 = vmatprep.subr.bf16.mxu0 0
    %2075 = vmatpush1.bf16.msra.mxu0 0
    %2076 = vmatprep.subr.bf16.mxu0 0
    %2077 = vmatpush1.bf16.msra.mxu0 0
    %2078 = vmatprep.subr.bf16.mxu0 0
    %2079 = vmatpush1.bf16.msra.mxu0 0
    %2080 = vmatprep.subr.bf16.mxu0 0
    %2081 = vmatpush1.bf16.msra.mxu0 0
    %2082 = vmatprep.subr.bf16.mxu0 0
    %2083 = vmatpush1.bf16.msra.mxu0 0
    %2084 = vmatprep.subr.bf16.mxu0 0
    %2085 = vmatpush1.bf16.msra.mxu0 0
    %2086 = vmatprep.subr.bf16.mxu0 0
    %2087 = vmatpush1.bf16.msra.mxu0 0
    %2088 = vmatprep.subr.bf16.mxu0 0
    %2089 = vmatpush1.bf16.msra.mxu0 0
    %2090 = vmatprep.subr.bf16.mxu0 0
    %2091 = vmatpush1.bf16.msra.mxu0 0
    %2092 = vmatprep.subr.bf16.mxu0 0
    %2093 = vmatpush1.bf16.msra.mxu0 0
    %2094 = vmatprep.subr.bf16.mxu0 0
    %2095 = vmatpush1.bf16.msra.mxu0 0
    %2096 = vmatprep.subr.bf16.mxu0 0
    %2097 = vmatpush1.bf16.msra.mxu0 0
    %2098 = vmatprep.subr.bf16.mxu0 0
    %2099 = vmatpush1.bf16.msra.mxu0 0
    %2100 = vmatprep.mubr.bf16.mxu0 0
    %2101 = vmatmul.mubr.bf16.gmra.mrb[0].mxu0 %v2066
    %v2102 = vpop.f32.mrb[0].mxu0
    %v2103 = vadd.f32 %v2051, %v2102
    %v2104 = vpop.f32.mrb[0].mxu0
    %v2105 = vpop.f32.mrb[0].mxu0
    %v2106 = vadd.f32 %v2051, %v2105
    %v2107 = vpop.f32.mrb[0].mxu0
    %2108 = vdwg.mxu0
    %v2109 = vmul.f32 %v2103, 0.5
    %v2110 = vmul.f32 %v2106, 0.5
    %v2111 = vmul.f32 %v2103, 0.044715
    %v2112 = vmul.f32 %v2106, 0.044715
    %v2113 = vmul.f32 %v2111, %v2103
    %v2114 = vmul.f32 %v2112, %v2106
    %v2115 = vmul.f32 %v2113, %v2103
    %v2116 = vmul.f32 %v2114, %v2106
    %v2117 = vadd.f32 %v2103, %v2115
    %v2118 = vadd.f32 %v2106, %v2116
    %v2119 = vmul.f32 %v2117, 0.7978846
    %v2120 = vmul.f32 %v2118, 0.7978846
    %v2121 = vtanh.pop %v2119
    %v2122 = vtanh.pop %v2120
    %v2123 = vadd.f32 %v2121, 1.0
    %v2124 = vadd.f32 %v2122, 1.0
    %v2125 = vmul.f32 %v2109, %v2123
    %v2126 = vmul.f32 %v2110, %v2124
    %v2127 = vpack.c.bf16 %v2126, %v2125
    %v2129 = vlaneseq
    %v2130 = vshrl.u32 %v2129, 7
    %v2131 = vsub.s32 0, %v2130
    %v2132 = vrot.slane %v94, %v2131
    %v2142 = vunpack.c.l.b16 %v86
    %v2143 = vunpack.c.l.b16 %v87
    %v2144 = vunpack.c.l.b16 %v88
    %v2145 = vunpack.c.l.b16 %v89
    %v2146 = vunpack.c.l.b16 %v90
    %v2147 = vunpack.c.l.b16 %v91
    %v2148 = vunpack.c.l.b16 %v92
    %v2149 = vunpack.c.l.b16 %v93
    %v2150 = vpack.c.b16 %v2143, %v2142
    %v2151 = vpack.c.b16 %v2145, %v2144
    %v2152 = vpack.c.b16 %v2147, %v2146
    %v2153 = vpack.c.b16 %v2149, %v2148
    %vm2158 = vcmask 523264
    %v2160 = vsel %vm2158, %v2127, 0
    %2162 = vmatprep.subr.bf16.mxu0 0
    %2163 = vmatpush1.bf16.msra.mxu0 %v2150
    %2164 = vmatprep.subr.bf16.mxu0 0
    %2165 = vmatpush1.bf16.msra.mxu0 %v2151
    %2166 = vmatprep.subr.bf16.mxu0 0
    %2167 = vmatpush1.bf16.msra.mxu0 %v2152
    %2168 = vmatprep.subr.bf16.mxu0 0
    %2169 = vmatpush1.bf16.msra.mxu0 %v2153
    %2170 = vmatprep.subr.bf16.mxu0 0
    %2171 = vmatpush1.bf16.msra.mxu0 0
    %2172 = vmatprep.subr.bf16.mxu0 0
    %2173 = vmatpush1.bf16.msra.mxu0 0
    %2174 = vmatprep.subr.bf16.mxu0 0
    %2175 = vmatpush1.bf16.msra.mxu0 0
    %2176 = vmatprep.subr.bf16.mxu0 0
    %2177 = vmatpush1.bf16.msra.mxu0 0
    %2178 = vmatprep.subr.bf16.mxu0 0
    %2179 = vmatpush1.bf16.msra.mxu0 0
    %2180 = vmatprep.subr.bf16.mxu0 0
    %2181 = vmatpush1.bf16.msra.mxu0 0
    %2182 = vmatprep.subr.bf16.mxu0 0
    %2183 = vmatpush1.bf16.msra.mxu0 0
    %2184 = vmatprep.subr.bf16.mxu0 0
    %2185 = vmatpush1.bf16.msra.mxu0 0
    %2186 = vmatprep.subr.bf16.mxu0 0
    %2187 = vmatpush1.bf16.msra.mxu0 0
    %2188 = vmatprep.subr.bf16.mxu0 0
    %2189 = vmatpush1.bf16.msra.mxu0 0
    %2190 = vmatprep.subr.bf16.mxu0 0
    %2191 = vmatpush1.bf16.msra.mxu0 0
    %2192 = vmatprep.subr.bf16.mxu0 0
    %2193 = vmatpush1.bf16.msra.mxu0 0
    %2194 = vmatprep.mubr.bf16.mxu0 0
    %2195 = vmatmul.mubr.bf16.gmra.mrb[0].mxu0 %v2160
    %v2196 = vpop.f32.mrb[0].mxu0
    %v2197 = vadd.f32 %v2132, %v2196
    %v2198 = vpop.f32.mrb[0].mxu0
    %v2199 = vpop.f32.mrb[0].mxu0
    %v2200 = vadd.f32 %v2132, %v2199
    %v2201 = vpop.f32.mrb[0].mxu0
    %2202 = vdwg.mxu0
    %v2203 = vadd.f32 %v2002, %v2197
    %v2204 = vadd.f32 %v2003, %v2200
    %v2205 = vsel %vm289, %v2203, 0.0
    %2206 = vadd.xlane.f32.xlu0 %v2205
    %v2207 = vpop.xlane.xlu0 %2206
    %v2208 = vsel %vm293, %v2204, 0.0
    %2209 = vadd.xlane.f32.xlu0 %v2208
    %v2210 = vpop.xlane.xlu0 %2209
    %v2211 = vmul.f32 %v2207, %v297
    %v2212 = vmul.f32 %v2210, %v297
    %v2213 = vsub.f32 %v2203, %v2211
    %v2214 = vsub.f32 %v2204, %v2212
    %v2215 = vmul.f32 %v2213, %v2213
    %v2216 = vmul.f32 %v2214, %v2214
    %v2217 = vsel %vm289, %v2215, 0.0
    %2218 = vadd.xlane.f32.xlu0 %v2217
    %v2219 = vpop.xlane.xlu0 %2218
    %v2220 = vsel %vm293, %v2216, 0.0
    %2221 = vadd.xlane.f32.xlu0 %v2220
    %v2222 = vpop.xlane.xlu0 %2221
    %v2223 = vmul.f32 %v2219, %v297
    %v2224 = vmul.f32 %v2222, %v297
    %v2225 = vadd.f32 %v2223, 1e-05
    %v2226 = vadd.f32 %v2224, 1e-05
    %v2227 = vrsqrt.pop %v2225
    %v2228 = vrsqrt.pop %v2226
    %v2229 = vmul.f32 %v2213, %v2227
    %v2230 = vmul.f32 %v2214, %v2228
    %v2232 = vlaneseq
    %v2233 = vshrl.u32 %v2232, 7
    %v2234 = vsub.s32 0, %v2233
    %v2235 = vrot.slane %v95, %v2234
    %v2237 = vmul.f32 %v2229, %v2235
    %v2238 = vmul.f32 %v2230, %v2235
    %v2240 = vlaneseq
    %v2241 = vshrl.u32 %v2240, 7
    %v2242 = vsub.s32 0, %v2241
    %v2243 = vrot.slane %v96, %v2242
    %v2245 = vadd.f32 %v2237, %v2243
    %v2246 = vadd.f32 %v2238, %v2243
    %2247 = vst.msk [vmem:[#allocation2] sm:$0xff] %vm289, %v2245
    %2248 = vst.msk [vmem:[#allocation2 + $0x8] sm:$0x3] %vm293, %v2246
    // Predicated region
    $region74: #{tpu_custom_call.1} parent=1 // pred_check
      _
    $region75: #{tpu_custom_call.1} parent=1 // pred_check_branch
      %2250 = sbr.rel (0) target = $region77
    $region76: #{tpu_custom_call.1} parent=1 // pred_region
      %s2252 = ssub.s32 256, 256
      %2253 = vsyncadd [#allocation3], %s2252
      %s2254 = sshll.u32 [#allocation2], 4
      %s2255 = int_to_ptr.vmem [resolvable:$true] %s2254
      %2260 = dma.vmem_to_hbm [thread:$0]  %s2255, 256, %s18, [#allocation3], 128, 128, 8
    $region77: #{tpu_custom_call.1} parent=1 // pred_fallthru
      _
    // Predicated region
    $region78: #{tpu_custom_call.1} parent=1 // pred_check
      _
    $region79: #{tpu_custom_call.1} parent=1 // pred_check_branch
      %2262 = sbr.rel (0) target = $region81
    $region80: #{tpu_custom_call.1} parent=1 // pred_region
      %2263 = dma.done [#allocation3], 256
    $region81: #{tpu_custom_call.1} parent=1 // pred_fallthru
      _
    %2264 = vsyncpa [#allocation3], 1

</llo_original>
